<compile_context>
chip_gen: v5e
topology: v5e:2x2
jax: 0.10.0
libtpu: 0.0.40
codegen_flags: <defaults>
</compile_context>

<pallas_src>
import numpy as np
import jax
import jax.numpy as jnp
from jax.experimental import pallas as pl
from jax.experimental.pallas import tpu as pltpu


def _round_up(x, m):
    return (x + m - 1) // m * m


# ---------------------------------------------------------------------------
# Pallas kernel: one grid step == one bottom-up wave of the forest.
# ---------------------------------------------------------------------------
def _tree_lstm_wave_kernel(emb_ref, lidx_ref, ridx_ref, didx_ref,
                           wx_ref, bx_ref, wl_ref, bl_ref, wr_ref, br_ref,
                           h_ref, c_ref):
    w = pl.program_id(0)
    S, H = h_ref.shape

    @pl.when(w == 0)
    def _():
        h_ref[...] = jnp.zeros_like(h_ref)
        c_ref[...] = jnp.zeros_like(c_ref)

    h_buf = h_ref[...]                                   # (S, H) f32, resident
    c_buf = c_ref[...]

    lidx = lidx_ref[0]                                   # (Wm, 1) int32
    ridx = ridx_ref[0]                                   # (Wm, 1) int32
    didx = didx_ref[0]                                   # (1, Wm) int32
    Wm = lidx.shape[0]

    # One-hot gather / scatter matrices built on the VPU (no dynamic gather).
    col = jax.lax.broadcasted_iota(jnp.int32, (Wm, S), 1)
    l_oh = (col == lidx).astype(jnp.float32)             # (Wm, S)
    r_oh = (col == ridx).astype(jnp.float32)             # (Wm, S)
    row = jax.lax.broadcasted_iota(jnp.int32, (S, Wm), 0)
    d_oh_t = (row == didx).astype(jnp.float32)           # (S, Wm)

    # Exact MXU gathers of child states (null children point at a zero slot).
    h_l = jnp.dot(l_oh, h_buf, preferred_element_type=jnp.float32)   # (Wm, H)
    h_r = jnp.dot(r_oh, h_buf, preferred_element_type=jnp.float32)
    c_l = jnp.dot(l_oh, c_buf, preferred_element_type=jnp.float32)
    c_r = jnp.dot(r_oh, c_buf, preferred_element_type=jnp.float32)

    # Gate pre-activations: one fused (Wm,H)@(H,4H) bf16 matmul per source.
    x = emb_ref[0].astype(jnp.bfloat16)                  # (Wm, H)
    gx = jnp.dot(x, wx_ref[...],
                 preferred_element_type=jnp.float32) + bx_ref[...]
    gl = jnp.dot(h_l.astype(jnp.bfloat16), wl_ref[...],
                 preferred_element_type=jnp.float32) + bl_ref[...]
    gr = jnp.dot(h_r.astype(jnp.bfloat16), wr_ref[...],
                 preferred_element_type=jnp.float32) + br_ref[...]

    i_g = jax.nn.sigmoid(gx[:, 0:H] + gl[:, 0:H] + gr[:, 0:H])
    o_g = jax.nn.sigmoid(gx[:, H:2 * H] + gl[:, H:2 * H] + gr[:, H:2 * H])
    u_g = jnp.tanh(gx[:, 2 * H:3 * H] + gl[:, 2 * H:3 * H] + gr[:, 2 * H:3 * H])
    f_l = jax.nn.sigmoid(gx[:, 3 * H:4 * H] + gl[:, 3 * H:4 * H])
    f_r = jax.nn.sigmoid(gx[:, 3 * H:4 * H] + gr[:, 3 * H:4 * H])

    c_new = i_g * u_g + f_l * c_l + f_r * c_r            # (Wm, H)
    h_new = o_g * jnp.tanh(c_new)

    # Additive one-hot scatter: every real slot is written exactly once across
    # all waves (buffers start at 0); padded rows land in a dump slot.
    h_ref[...] = h_buf + jnp.dot(d_oh_t, h_new, preferred_element_type=jnp.float32)
    c_ref[...] = c_buf + jnp.dot(d_oh_t, c_new, preferred_element_type=jnp.float32)


# ---------------------------------------------------------------------------
# Host-side wave schedule (mirrors the queue batching of TreeEncoder.forward).
# managers: list (length B) of trees; each tree is a list of
#   {"token": int, "l": child index or None, "r": child index or None}
# Node (b, i) lives in state-table slot b*n_max + i; slot B*n_max is an
# always-zero slot (null children), slot B*n_max+1 is a dump slot for padding.
# ---------------------------------------------------------------------------
def build_forest_schedule(managers, n_max):
    B = len(managers)
    zero_slot = B * n_max
    dump_slot = B * n_max + 1
    S = _round_up(B * n_max + 2, 8)

    levels = []
    for trees in managers:
        lev = [0] * len(trees)
        for i in reversed(range(len(trees))):            # children have larger index
            t = trees[i]
            ll = lev[t["l"]] + 1 if t["l"] is not None else 0
            rr = lev[t["r"]] + 1 if t["r"] is not None else 0
            lev[i] = max(ll, rr)
        levels.append(lev)

    num_waves = 1 + max(max(lev) for lev in levels)
    waves = [[] for _ in range(num_waves)]
    for b, trees in enumerate(managers):
        for i in range(len(trees)):
            waves[levels[b][i]].append((b, i))

    w_max = _round_up(max(len(wv) for wv in waves), 8)

    tokens = np.zeros((num_waves, w_max), np.int32)
    lidx = np.full((num_waves, w_max, 1), zero_slot, np.int32)
    ridx = np.full((num_waves, w_max, 1), zero_slot, np.int32)
    didx = np.full((num_waves, 1, w_max), dump_slot, np.int32)
    for w, wave in enumerate(waves):
        for r, (b, i) in enumerate(wave):
            t = managers[b][i]
            tokens[w, r] = t["token"]
            if t["l"] is not None:
                lidx[w, r, 0] = b * n_max + t["l"]
            if t["r"] is not None:
                ridx[w, r, 0] = b * n_max + t["r"]
            didx[w, 0, r] = b * n_max + i
    return tokens, lidx, ridx, didx, S


# ---------------------------------------------------------------------------
# Full forward (TreeEncoder.forward equivalent).
# ---------------------------------------------------------------------------
def tree_encoder_forward(params, managers):
    B = len(managers)
    n_max = max(len(m) for m in managers)
    H = params["wl"].shape[0]

    tokens, lidx, ridx, didx, S = build_forest_schedule(managers, n_max)
    num_waves, w_max = tokens.shape

    emb_waves = params["embedding"][jnp.asarray(tokens)]          # (W, w_max, H)

    def wspec(shape):
        return pl.BlockSpec(shape, lambda w: (0, 0))

    h_all, c_all = pl.pallas_call(
        _tree_lstm_wave_kernel,
        grid=(num_waves,),
        in_specs=[
            pl.BlockSpec((1, w_max, H), lambda w: (w, 0, 0)),     # embeddings
            pl.BlockSpec((1, w_max, 1), lambda w: (w, 0, 0)),     # left-child slots
            pl.BlockSpec((1, w_max, 1), lambda w: (w, 0, 0)),     # right-child slots
            pl.BlockSpec((1, 1, w_max), lambda w: (w, 0, 0)),     # destination slots
            wspec((H, 4 * H)), wspec((1, 4 * H)),                 # wx, bx
            wspec((H, 4 * H)), wspec((1, 4 * H)),                 # wl, bl
            wspec((H, 4 * H)), wspec((1, 4 * H)),                 # wr, br
        ],
        out_specs=(
            pl.BlockSpec((S, H), lambda w: (0, 0)),               # h table (resident)
            pl.BlockSpec((S, H), lambda w: (0, 0)),               # c table (resident)
        ),
        out_shape=(
            jax.ShapeDtypeStruct((S, H), jnp.float32),
            jax.ShapeDtypeStruct((S, H), jnp.float32),
        ),
        compiler_params=pltpu.CompilerParams(
            dimension_semantics=("arbitrary",)),
    )(emb_waves, jnp.asarray(lidx), jnp.asarray(ridx), jnp.asarray(didx),
      params["wx"].astype(jnp.bfloat16), params["bx"],
      params["wl"].astype(jnp.bfloat16), params["bl"],
      params["wr"].astype(jnp.bfloat16), params["br"])

    h_nodes = h_all[:B * n_max].reshape(B, n_max, H)   # padded slots stay zero
    c_nodes = c_all[:B * n_max].reshape(B, n_max, H)

    mask = np.ones((B, n_max), np.uint8)               # 1 == padding (ByteTensor)
    for b, trees in enumerate(managers):
        mask[b, :len(trees)] = 0
    mask = jnp.asarray(mask)

    enc_h_state = h_nodes[:, 0, :]                     # root == tree index 0
    enc_c_state = c_nodes[:, 0, :]
    return h_nodes, mask, enc_h_state, enc_c_state


# ---------------------------------------------------------------------------
# Deterministic parameter init.  Packed gate layout, gate order [i, o, u, f]:
#   wx = [ix^T | ox^T | ux^T | fx^T]    (H, 4H),  bx its biases
#   wl = [ilh^T| olh^T| ulh^T| flh^T]   (H, 4H),  bl its biases
#   wr = [irh^T| orh^T| urh^T| frh^T]   (H, 4H),  br its biases
# ---------------------------------------------------------------------------
def init_params(key, vocab, H, scale=0.1):
    ks = jax.random.split(key, 7)

    def u(k, shape):
        return jax.random.uniform(k, shape, jnp.float32, -scale, scale)

    return {
        "embedding": u(ks[0], (vocab, H)),
        "wx": u(ks[1], (H, 4 * H)), "bx": u(ks[2], (1, 4 * H)),
        "wl": u(ks[3], (H, 4 * H)), "bl": u(ks[4], (1, 4 * H)),
        "wr": u(ks[5], (H, 4 * H)), "br": u(ks[6], (1, 4 * H)),
    }


# ---------------------------------------------------------------------------
# Pure-JAX reference (node-by-node, independent of the wave batching).
# ---------------------------------------------------------------------------
def _calc_root_ref(params, x, h_l, h_r, c_l, c_r):
    H = params["wl"].shape[0]
    gx = x @ params["wx"] + params["bx"][0]
    gl = h_l @ params["wl"] + params["bl"][0]
    gr = h_r @ params["wr"] + params["br"][0]
    i = jax.nn.sigmoid(gx[0:H] + gl[0:H] + gr[0:H])
    o = jax.nn.sigmoid(gx[H:2 * H] + gl[H:2 * H] + gr[H:2 * H])
    u = jnp.tanh(gx[2 * H:3 * H] + gl[2 * H:3 * H] + gr[2 * H:3 * H])
    f_l = jax.nn.sigmoid(gx[3 * H:4 * H] + gl[3 * H:4 * H])
    f_r = jax.nn.sigmoid(gx[3 * H:4 * H] + gr[3 * H:4 * H])
    c = i * u + f_l * c_l + f_r * c_r
    h = o * jnp.tanh(c)
    return h, c


def tree_encoder_forward_ref(params, managers):
    B = len(managers)
    n_max = max(len(m) for m in managers)
    H = params["wl"].shape[0]
    zero = jnp.zeros((H,), jnp.float32)
    states = {}
    for b, trees in enumerate(managers):
        for i in reversed(range(len(trees))):
            t = trees[i]
            x = params["embedding"][t["token"]]
            h_l, c_l = states[(b, t["l"])] if t["l"] is not None else (zero, zero)
            h_r, c_r = states[(b, t["r"])] if t["r"] is not None else (zero, zero)
            states[(b, i)] = _calc_root_ref(params, x, h_l, h_r, c_l, c_r)

    enc = jnp.zeros((B, n_max, H), jnp.float32)
    mask = np.ones((B, n_max), np.uint8)
    for b, trees in enumerate(managers):
        mask[b, :len(trees)] = 0
        for i in range(len(trees)):
            enc = enc.at[b, i].set(states[(b, i)][0])
    h_root = jnp.stack([states[(b, 0)][0] for b in range(B)])
    c_root = jnp.stack([states[(b, 0)][1] for b in range(B)])
    return enc, jnp.asarray(mask), h_root, c_root


if __name__ == "__main__":
    B = 4
    H = 32                     # hidden_size == embedding_size (required by the module)
    VOCAB = 32                 # source_vocab_size
    depths = [4, 3, 3, 2]      # complete binary trees: 15 / 7 / 7 / 3 nodes

    key = jax.random.PRNGKey(0)
    pkey, tkey = jax.random.split(key)
    params = init_params(pkey, VOCAB, H)

    num_nodes = [2 ** d - 1 for d in depths]
    toks = np.asarray(jax.random.randint(tkey, (sum(num_nodes),), 0, VOCAB,
                                         dtype=jnp.int32))
    managers = []
    off = 0
    for n in num_nodes:
        trees = []
        for i in range(n):
            trees.append({
                "token": int(toks[off + i]),
                "l": 2 * i + 1 if 2 * i + 1 < n else None,
                "r": 2 * i + 2 if 2 * i + 2 < n else None,
            })
        managers.append(trees)
        off += n

    enc_out, mask, h_root, c_root = tree_encoder_forward(params, managers)
    enc_out = jax.block_until_ready(enc_out)
    h_root = jax.block_until_ready(h_root)
    c_root = jax.block_until_ready(c_root)

    enc_ref, mask_ref, h_ref, c_ref = tree_encoder_forward_ref(params, managers)
    assert enc_out.shape == (B, max(num_nodes), H)
    assert bool(jnp.all(jnp.isfinite(enc_out)))
    assert bool(jnp.all(mask == mask_ref))
    err = max(float(jnp.max(jnp.abs(enc_out - enc_ref))),
              float(jnp.max(jnp.abs(h_root - h_ref))),
              float(jnp.max(jnp.abs(c_root - c_ref))))
    assert err < 3e-2, f"mismatch vs reference: {err}"
    print("KERNEL_OK")
</pallas_src>

<mosaic_0001>
module attributes {stable_mosaic.version = 11 : i64} {
  func.func @_tree_lstm_wave_kernel(%arg0: i32, %arg1: memref<1x24x32xf32, #tpu.memory_space<vmem>>, %arg2: memref<1x24x1xi32, #tpu.memory_space<vmem>>, %arg3: memref<1x24x1xi32, #tpu.memory_space<vmem>>, %arg4: memref<1x1x24xi32, #tpu.memory_space<vmem>>, %arg5: memref<32x128xbf16, #tpu.memory_space<vmem>>, %arg6: memref<1x128xf32, #tpu.memory_space<vmem>>, %arg7: memref<32x128xbf16, #tpu.memory_space<vmem>>, %arg8: memref<1x128xf32, #tpu.memory_space<vmem>>, %arg9: memref<32x128xbf16, #tpu.memory_space<vmem>>, %arg10: memref<1x128xf32, #tpu.memory_space<vmem>>, %arg11: memref<64x32xf32, #tpu.memory_space<vmem>>, %arg12: memref<64x32xf32, #tpu.memory_space<vmem>>) attributes {dimension_semantics = [#tpu.dimension_semantics<arbitrary>], iteration_bounds = array<i64: 4>, scalar_prefetch = 0 : i64, scratch_operands = 0 : i64, tpu.core_type = #tpu.core_type<tc>, window_params = [{transform_indices = @transform_0, window_bounds = array<i64: 1, 24, 32>}, {transform_indices = @transform_1, window_bounds = array<i64: 1, 24, 1>}, {transform_indices = @transform_2, window_bounds = array<i64: 1, 24, 1>}, {transform_indices = @transform_3, window_bounds = array<i64: 1, 1, 24>}, {pipeline_mode = #tpu.pipeline_mode<synchronous>, transform_indices = @transform_4, window_bounds = array<i64: 32, 128>}, {pipeline_mode = #tpu.pipeline_mode<synchronous>, transform_indices = @transform_5, window_bounds = array<i64: 1, 128>}, {pipeline_mode = #tpu.pipeline_mode<synchronous>, transform_indices = @transform_6, window_bounds = array<i64: 32, 128>}, {pipeline_mode = #tpu.pipeline_mode<synchronous>, transform_indices = @transform_7, window_bounds = array<i64: 1, 128>}, {pipeline_mode = #tpu.pipeline_mode<synchronous>, transform_indices = @transform_8, window_bounds = array<i64: 32, 128>}, {pipeline_mode = #tpu.pipeline_mode<synchronous>, transform_indices = @transform_9, window_bounds = array<i64: 1, 128>}, {pipeline_mode = #tpu.pipeline_mode<synchronous>, transform_indices = @transform_10, window_bounds = array<i64: 64, 32>}, {pipeline_mode = #tpu.pipeline_mode<synchronous>, transform_indices = @transform_11, window_bounds = array<i64: 64, 32>}]} {
    %c0_i32 = arith.constant 0 : i32
    %0 = arith.cmpi eq, %arg0, %c0_i32 : i32
    %1 = arith.extui %0 : i1 to i32
    %c0_i32_0 = arith.constant 0 : i32
    %2 = arith.cmpi ne, %1, %c0_i32_0 : i32
    scf.if %2 {
      %cst_44 = arith.constant 0.000000e+00 : f32
      %104 = vector.broadcast %cst_44 : f32 to vector<64x32xf32>
      %c0_45 = arith.constant 0 : index
      %c0_46 = arith.constant 0 : index
      %105 = vector.load %arg11[%c0_45, %c0_46] : memref<64x32xf32, #tpu.memory_space<vmem>>, vector<64x32xf32>
      tpu.vector_store %arg11[%c0_45, %c0_46], %104 {strides = array<i32>} : memref<64x32xf32, #tpu.memory_space<vmem>>, vector<64x32xf32>,
      %cst_47 = arith.constant 0.000000e+00 : f32
      %106 = vector.broadcast %cst_47 : f32 to vector<64x32xf32>
      %c0_48 = arith.constant 0 : index
      %c0_49 = arith.constant 0 : index
      %107 = vector.load %arg12[%c0_48, %c0_49] : memref<64x32xf32, #tpu.memory_space<vmem>>, vector<64x32xf32>
      tpu.vector_store %arg12[%c0_48, %c0_49], %106 {strides = array<i32>} : memref<64x32xf32, #tpu.memory_space<vmem>>, vector<64x32xf32>,
    } else {
    }
    %c0 = arith.constant 0 : index
    %c0_1 = arith.constant 0 : index
    %3 = vector.load %arg11[%c0, %c0_1] : memref<64x32xf32, #tpu.memory_space<vmem>>, vector<64x32xf32>
    %c0_2 = arith.constant 0 : index
    %c0_3 = arith.constant 0 : index
    %4 = vector.load %arg12[%c0_2, %c0_3] : memref<64x32xf32, #tpu.memory_space<vmem>>, vector<64x32xf32>
    %c0_4 = arith.constant 0 : index
    %c0_5 = arith.constant 0 : index
    %c0_6 = arith.constant 0 : index
    %5 = vector.load %arg2[%c0_4, %c0_5, %c0_6] : memref<1x24x1xi32, #tpu.memory_space<vmem>>, vector<1x24x1xi32>
    %6 = vector.shape_cast %5 : vector<1x24x1xi32> to vector<24x1xi32>
    %c0_7 = arith.constant 0 : index
    %c0_8 = arith.constant 0 : index
    %c0_9 = arith.constant 0 : index
    %7 = vector.load %arg3[%c0_7, %c0_8, %c0_9] : memref<1x24x1xi32, #tpu.memory_space<vmem>>, vector<1x24x1xi32>
    %8 = vector.shape_cast %7 : vector<1x24x1xi32> to vector<24x1xi32>
    %c0_10 = arith.constant 0 : index
    %c0_11 = arith.constant 0 : index
    %c0_12 = arith.constant 0 : index
    %9 = vector.load %arg4[%c0_10, %c0_11, %c0_12] : memref<1x1x24xi32, #tpu.memory_space<vmem>>, vector<1x1x24xi32>
    %10 = vector.shape_cast %9 : vector<1x1x24xi32> to vector<1x24xi32>
    %11 = tpu.iota {dimensions = array<i32: 1>} : vector<24x64xi32>
    %12 = vector.broadcast %6 : vector<24x1xi32> to vector<24x64xi32>
    %13 = arith.cmpi eq, %11, %12 : vector<24x64xi32>
    %14 = arith.extui %13 : vector<24x64xi1> to vector<24x64xi32>
    %15 = arith.sitofp %14 : vector<24x64xi32> to vector<24x64xf32>
    %16 = vector.broadcast %8 : vector<24x1xi32> to vector<24x64xi32>
    %17 = arith.cmpi eq, %11, %16 : vector<24x64xi32>
    %18 = arith.extui %17 : vector<24x64xi1> to vector<24x64xi32>
    %19 = arith.sitofp %18 : vector<24x64xi32> to vector<24x64xf32>
    %20 = tpu.iota {dimensions = array<i32: 0>} : vector<64x24xi32>
    %21 = vector.broadcast %10 : vector<1x24xi32> to vector<64x24xi32>
    %22 = arith.cmpi eq, %20, %21 : vector<64x24xi32>
    %23 = arith.extui %22 : vector<64x24xi1> to vector<64x24xi32>
    %24 = arith.sitofp %23 : vector<64x24xi32> to vector<64x24xf32>
    %cst = arith.constant dense<0.000000e+00> : vector<24x32xf32>
    %25 = tpu.matmul %15, %3, %cst {dimension_numbers = #tpu.dot_dimension_numbers<[1], [0], [0], [1], [0, 0, 1, 1], [], []>} : vector<24x64xf32>, vector<64x32xf32>, vector<24x32xf32> -> vector<24x32xf32>
    %cst_13 = arith.constant dense<0.000000e+00> : vector<24x32xf32>
    %26 = tpu.matmul %19, %3, %cst_13 {dimension_numbers = #tpu.dot_dimension_numbers<[1], [0], [0], [1], [0, 0, 1, 1], [], []>} : vector<24x64xf32>, vector<64x32xf32>, vector<24x32xf32> -> vector<24x32xf32>
    %cst_14 = arith.constant dense<0.000000e+00> : vector<24x32xf32>
    %27 = tpu.matmul %15, %4, %cst_14 {dimension_numbers = #tpu.dot_dimension_numbers<[1], [0], [0], [1], [0, 0, 1, 1], [], []>} : vector<24x64xf32>, vector<64x32xf32>, vector<24x32xf32> -> vector<24x32xf32>
    %cst_15 = arith.constant dense<0.000000e+00> : vector<24x32xf32>
    %28 = tpu.matmul %19, %4, %cst_15 {dimension_numbers = #tpu.dot_dimension_numbers<[1], [0], [0], [1], [0, 0, 1, 1], [], []>} : vector<24x64xf32>, vector<64x32xf32>, vector<24x32xf32> -> vector<24x32xf32>
    %c0_16 = arith.constant 0 : index
    %c0_17 = arith.constant 0 : index
    %c0_18 = arith.constant 0 : index
    %29 = vector.load %arg1[%c0_16, %c0_17, %c0_18] : memref<1x24x32xf32, #tpu.memory_space<vmem>>, vector<1x24x32xf32>
    %30 = vector.shape_cast %29 : vector<1x24x32xf32> to vector<24x32xf32>
    %31 = arith.truncf %30 : vector<24x32xf32> to vector<24x32xbf16>
    %c0_19 = arith.constant 0 : index
    %c0_20 = arith.constant 0 : index
    %32 = vector.load %arg5[%c0_19, %c0_20] : memref<32x128xbf16, #tpu.memory_space<vmem>>, vector<32x128xbf16>
    %cst_21 = arith.constant dense<0.000000e+00> : vector<24x128xf32>
    %33 = tpu.matmul %31, %32, %cst_21 {dimension_numbers = #tpu.dot_dimension_numbers<[1], [0], [0], [1], [0, 0, 1, 1], [], []>} : vector<24x32xbf16>, vector<32x128xbf16>, vector<24x128xf32> -> vector<24x128xf32>
    %c0_22 = arith.constant 0 : index
    %c0_23 = arith.constant 0 : index
    %34 = vector.load %arg6[%c0_22, %c0_23] : memref<1x128xf32, #tpu.memory_space<vmem>>, vector<1x128xf32>
    %35 = vector.broadcast %34 : vector<1x128xf32> to vector<24x128xf32>
    %36 = arith.addf %33, %35 : vector<24x128xf32>
    %37 = arith.truncf %25 : vector<24x32xf32> to vector<24x32xbf16>
    %c0_24 = arith.constant 0 : index
    %c0_25 = arith.constant 0 : index
    %38 = vector.load %arg7[%c0_24, %c0_25] : memref<32x128xbf16, #tpu.memory_space<vmem>>, vector<32x128xbf16>
    %cst_26 = arith.constant dense<0.000000e+00> : vector<24x128xf32>
    %39 = tpu.matmul %37, %38, %cst_26 {dimension_numbers = #tpu.dot_dimension_numbers<[1], [0], [0], [1], [0, 0, 1, 1], [], []>} : vector<24x32xbf16>, vector<32x128xbf16>, vector<24x128xf32> -> vector<24x128xf32>
    %c0_27 = arith.constant 0 : index
    %c0_28 = arith.constant 0 : index
    %40 = vector.load %arg8[%c0_27, %c0_28] : memref<1x128xf32, #tpu.memory_space<vmem>>, vector<1x128xf32>
    %41 = vector.broadcast %40 : vector<1x128xf32> to vector<24x128xf32>
    %42 = arith.addf %39, %41 : vector<24x128xf32>
    %43 = arith.truncf %26 : vector<24x32xf32> to vector<24x32xbf16>
    %c0_29 = arith.constant 0 : index
    %c0_30 = arith.constant 0 : index
    %44 = vector.load %arg9[%c0_29, %c0_30] : memref<32x128xbf16, #tpu.memory_space<vmem>>, vector<32x128xbf16>
    %cst_31 = arith.constant dense<0.000000e+00> : vector<24x128xf32>
    %45 = tpu.matmul %43, %44, %cst_31 {dimension_numbers = #tpu.dot_dimension_numbers<[1], [0], [0], [1], [0, 0, 1, 1], [], []>} : vector<24x32xbf16>, vector<32x128xbf16>, vector<24x128xf32> -> vector<24x128xf32>
    %c0_32 = arith.constant 0 : index
    %c0_33 = arith.constant 0 : index
    %46 = vector.load %arg10[%c0_32, %c0_33] : memref<1x128xf32, #tpu.memory_space<vmem>>, vector<1x128xf32>
    %47 = vector.broadcast %46 : vector<1x128xf32> to vector<24x128xf32>
    %48 = arith.addf %45, %47 : vector<24x128xf32>
    %49 = vector.extract_strided_slice %36 {offsets = [0, 0], sizes = [24, 32], strides = [1, 1]} : vector<24x128xf32> to vector<24x32xf32>
    %50 = vector.extract_strided_slice %42 {offsets = [0, 0], sizes = [24, 32], strides = [1, 1]} : vector<24x128xf32> to vector<24x32xf32>
    %51 = arith.addf %49, %50 : vector<24x32xf32>
    %52 = vector.extract_strided_slice %48 {offsets = [0, 0], sizes = [24, 32], strides = [1, 1]} : vector<24x128xf32> to vector<24x32xf32>
    %53 = arith.addf %51, %52 : vector<24x32xf32>
    %54 = arith.negf %53 : vector<24x32xf32>
    %55 = math.exp %54 : vector<24x32xf32>
    %cst_34 = arith.constant 1.000000e+00 : f32
    %56 = vector.broadcast %cst_34 : f32 to vector<24x32xf32>
    %57 = arith.addf %56, %55 : vector<24x32xf32>
    %58 = arith.divf %56, %57 : vector<24x32xf32>
    %59 = vector.extract_strided_slice %36 {offsets = [0, 32], sizes = [24, 32], strides = [1, 1]} : vector<24x128xf32> to vector<24x32xf32>
    %60 = vector.extract_strided_slice %42 {offsets = [0, 32], sizes = [24, 32], strides = [1, 1]} : vector<24x128xf32> to vector<24x32xf32>
    %61 = arith.addf %59, %60 : vector<24x32xf32>
    %62 = vector.extract_strided_slice %48 {offsets = [0, 32], sizes = [24, 32], strides = [1, 1]} : vector<24x128xf32> to vector<24x32xf32>
    %63 = arith.addf %61, %62 : vector<24x32xf32>
    %64 = arith.negf %63 : vector<24x32xf32>
    %65 = math.exp %64 : vector<24x32xf32>
    %cst_35 = arith.constant 1.000000e+00 : f32
    %66 = vector.broadcast %cst_35 : f32 to vector<24x32xf32>
    %67 = arith.addf %66, %65 : vector<24x32xf32>
    %68 = arith.divf %66, %67 : vector<24x32xf32>
    %69 = vector.extract_strided_slice %36 {offsets = [0, 64], sizes = [24, 32], strides = [1, 1]} : vector<24x128xf32> to vector<24x32xf32>
    %70 = vector.extract_strided_slice %42 {offsets = [0, 64], sizes = [24, 32], strides = [1, 1]} : vector<24x128xf32> to vector<24x32xf32>
    %71 = arith.addf %69, %70 : vector<24x32xf32>
    %72 = vector.extract_strided_slice %48 {offsets = [0, 64], sizes = [24, 32], strides = [1, 1]} : vector<24x128xf32> to vector<24x32xf32>
    %73 = arith.addf %71, %72 : vector<24x32xf32>
    %74 = math.tanh %73 : vector<24x32xf32>
    %75 = vector.extract_strided_slice %36 {offsets = [0, 96], sizes = [24, 32], strides = [1, 1]} : vector<24x128xf32> to vector<24x32xf32>
    %76 = vector.extract_strided_slice %42 {offsets = [0, 96], sizes = [24, 32], strides = [1, 1]} : vector<24x128xf32> to vector<24x32xf32>
    %77 = arith.addf %75, %76 : vector<24x32xf32>
    %78 = arith.negf %77 : vector<24x32xf32>
    %79 = math.exp %78 : vector<24x32xf32>
    %cst_36 = arith.constant 1.000000e+00 : f32
    %80 = vector.broadcast %cst_36 : f32 to vector<24x32xf32>
    %81 = arith.addf %80, %79 : vector<24x32xf32>
    %82 = arith.divf %80, %81 : vector<24x32xf32>
    %83 = vector.extract_strided_slice %36 {offsets = [0, 96], sizes = [24, 32], strides = [1, 1]} : vector<24x128xf32> to vector<24x32xf32>
    %84 = vector.extract_strided_slice %48 {offsets = [0, 96], sizes = [24, 32], strides = [1, 1]} : vector<24x128xf32> to vector<24x32xf32>
    %85 = arith.addf %83, %84 : vector<24x32xf32>
    %86 = arith.negf %85 : vector<24x32xf32>
    %87 = math.exp %86 : vector<24x32xf32>
    %cst_37 = arith.constant 1.000000e+00 : f32
    %88 = vector.broadcast %cst_37 : f32 to vector<24x32xf32>
    %89 = arith.addf %88, %87 : vector<24x32xf32>
    %90 = arith.divf %88, %89 : vector<24x32xf32>
    %91 = arith.mulf %58, %74 : vector<24x32xf32>
    %92 = arith.mulf %82, %27 : vector<24x32xf32>
    %93 = arith.addf %91, %92 : vector<24x32xf32>
    %94 = arith.mulf %90, %28 : vector<24x32xf32>
    %95 = arith.addf %93, %94 : vector<24x32xf32>
    %96 = math.tanh %95 : vector<24x32xf32>
    %97 = arith.mulf %68, %96 : vector<24x32xf32>
    %cst_38 = arith.constant dense<0.000000e+00> : vector<64x32xf32>
    %98 = tpu.matmul %24, %97, %cst_38 {dimension_numbers = #tpu.dot_dimension_numbers<[1], [0], [0], [1], [0, 0, 1, 1], [], []>} : vector<64x24xf32>, vector<24x32xf32>, vector<64x32xf32> -> vector<64x32xf32>
    %99 = arith.addf %3, %98 : vector<64x32xf32>
    %c0_39 = arith.constant 0 : index
    %c0_40 = arith.constant 0 : index
    %100 = vector.load %arg11[%c0_39, %c0_40] : memref<64x32xf32, #tpu.memory_space<vmem>>, vector<64x32xf32>
    tpu.vector_store %arg11[%c0_39, %c0_40], %99 {strides = array<i32>} : memref<64x32xf32, #tpu.memory_space<vmem>>, vector<64x32xf32>,
    %cst_41 = arith.constant dense<0.000000e+00> : vector<64x32xf32>
    %101 = tpu.matmul %24, %95, %cst_41 {dimension_numbers = #tpu.dot_dimension_numbers<[1], [0], [0], [1], [0, 0, 1, 1], [], []>} : vector<64x24xf32>, vector<24x32xf32>, vector<64x32xf32> -> vector<64x32xf32>
    %102 = arith.addf %4, %101 : vector<64x32xf32>
    %c0_42 = arith.constant 0 : index
    %c0_43 = arith.constant 0 : index
    %103 = vector.load %arg12[%c0_42, %c0_43] : memref<64x32xf32, #tpu.memory_space<vmem>>, vector<64x32xf32>
    tpu.vector_store %arg12[%c0_42, %c0_43], %102 {strides = array<i32>} : memref<64x32xf32, #tpu.memory_space<vmem>>, vector<64x32xf32>,
    return
  }
  func.func @transform_0(%arg0: i32) -> (i32, i32, i32) {
    %c0_i32 = arith.constant 0 : i32
    %c0_i32_0 = arith.constant 0 : i32
    %c0_i32_1 = arith.constant 0 : i32
    return %arg0, %c0_i32, %c0_i32_0 : i32, i32, i32
  }
  func.func @transform_1(%arg0: i32) -> (i32, i32, i32) {
    %c0_i32 = arith.constant 0 : i32
    %c0_i32_0 = arith.constant 0 : i32
    %c0_i32_1 = arith.constant 0 : i32
    return %arg0, %c0_i32, %c0_i32_0 : i32, i32, i32
  }
  func.func @transform_2(%arg0: i32) -> (i32, i32, i32) {
    %c0_i32 = arith.constant 0 : i32
    %c0_i32_0 = arith.constant 0 : i32
    %c0_i32_1 = arith.constant 0 : i32
    return %arg0, %c0_i32, %c0_i32_0 : i32, i32, i32
  }
  func.func @transform_3(%arg0: i32) -> (i32, i32, i32) {
    %c0_i32 = arith.constant 0 : i32
    %c0_i32_0 = arith.constant 0 : i32
    %c0_i32_1 = arith.constant 0 : i32
    return %arg0, %c0_i32, %c0_i32_0 : i32, i32, i32
  }
  func.func @transform_4(%arg0: i32) -> (i32, i32) {
    %c0_i32 = arith.constant 0 : i32
    %c0_i32_0 = arith.constant 0 : i32
    %c0_i32_1 = arith.constant 0 : i32
    return %c0_i32, %c0_i32_0 : i32, i32
  }
  func.func @transform_5(%arg0: i32) -> (i32, i32) {
    %c0_i32 = arith.constant 0 : i32
    %c0_i32_0 = arith.constant 0 : i32
    %c0_i32_1 = arith.constant 0 : i32
    return %c0_i32, %c0_i32_0 : i32, i32
  }
  func.func @transform_6(%arg0: i32) -> (i32, i32) {
    %c0_i32 = arith.constant 0 : i32
    %c0_i32_0 = arith.constant 0 : i32
    %c0_i32_1 = arith.constant 0 : i32
    return %c0_i32, %c0_i32_0 : i32, i32
  }
  func.func @transform_7(%arg0: i32) -> (i32, i32) {
    %c0_i32 = arith.constant 0 : i32
    %c0_i32_0 = arith.constant 0 : i32
    %c0_i32_1 = arith.constant 0 : i32
    return %c0_i32, %c0_i32_0 : i32, i32
  }
  func.func @transform_8(%arg0: i32) -> (i32, i32) {
    %c0_i32 = arith.constant 0 : i32
    %c0_i32_0 = arith.constant 0 : i32
    %c0_i32_1 = arith.constant 0 : i32
    return %c0_i32, %c0_i32_0 : i32, i32
  }
  func.func @transform_9(%arg0: i32) -> (i32, i32) {
    %c0_i32 = arith.constant 0 : i32
    %c0_i32_0 = arith.constant 0 : i32
    %c0_i32_1 = arith.constant 0 : i32
    return %c0_i32, %c0_i32_0 : i32, i32
  }
  func.func @transform_10(%arg0: i32) -> (i32, i32) {
    %c0_i32 = arith.constant 0 : i32
    %c0_i32_0 = arith.constant 0 : i32
    %c0_i32_1 = arith.constant 0 : i32
    return %c0_i32, %c0_i32_0 : i32, i32
  }
  func.func @transform_11(%arg0: i32) -> (i32, i32) {
    %c0_i32 = arith.constant 0 : i32
    %c0_i32_0 = arith.constant 0 : i32
    %c0_i32_1 = arith.constant 0 : i32
    return %c0_i32, %c0_i32_0 : i32, i32
  }
}

</mosaic_0001>

<llo_original>
// kernel: tpu_custom_call.1
$region0: #{tpu_custom_call.1}
  #allocation0 [shape = 'u32[]', space=smem, size = 0x4, offset = 0x4, fixed_abs, tag = 'smem constant byte address 0x4 - core index']
  #allocation1 [shape = 'u32[72,128]{1,0:T(1,128)}', space=vmem, size = 0x9000, scoped, tag = 'internal scratch']
  %s0 = inlined_call_operand.vmem [shape: f32[4,24,32], index: 0, kind: input, shape index: {}]
  %s1 = inlined_call_operand.vmem [shape: s32[4,24,1], index: 1, kind: input, shape index: {}]
  %s2 = inlined_call_operand.vmem [shape: s32[4,24,1], index: 2, kind: input, shape index: {}]
  %s3 = inlined_call_operand.vmem [shape: s32[4,1,24], index: 3, kind: input, shape index: {}]
  %s4 = inlined_call_operand.vmem [shape: bf16[32,128], index: 4, kind: input, shape index: {}]
  %s5 = inlined_call_operand.vmem [shape: f32[1,128], index: 5, kind: input, shape index: {}]
  %s6 = inlined_call_operand.vmem [shape: bf16[32,128], index: 6, kind: input, shape index: {}]
  %s7 = inlined_call_operand.vmem [shape: f32[1,128], index: 7, kind: input, shape index: {}]
  %s8 = inlined_call_operand.vmem [shape: bf16[32,128], index: 8, kind: input, shape index: {}]
  %s9 = inlined_call_operand.vmem [shape: f32[1,128], index: 9, kind: input, shape index: {}]
  %s10 = inlined_call_operand.vmem [shape: f32[64,32], index: 10, kind: output, shape index: {0}]
  %s11 = inlined_call_operand.vmem [shape: f32[64,32], index: 11, kind: output, shape index: {1}]
  %12 = xla_tuple %s10, %s11
  %s13 = sld [smem:[#allocation0]]
  $region85: #{tpu_custom_call.1} parent=0
    _
  %s15 = ssub.s32 1, %s13
  %s16 = scalar_select 0, %s15, %s13
  loop: start=0, step=1, limit=6
  $region2: #{tpu_custom_call.1} parent=0 // loop_pre_header
    _
  $region3: #{tpu_custom_call.1} parent=0 // loop_header
    %s18 = sphi 0, %s22
    %p19 = scmp.ge.s32.totalorder %s18, 6
    %s28 = sphi 0, %s30
    %s31 = sphi 0, %s28
    %s32 = sphi 0, %s31
    %s48 = sphi 0, %s32
    %s54 = sphi 0, %s56
    %s57 = sphi 0, %s54
    %s58 = sphi 0, %s57
    %s74 = sphi 0, %s58
    %s80 = sphi 0, %s82
    %s83 = sphi 0, %s80
    %s84 = sphi 0, %s83
    %s100 = sphi 0, %s84
    %s106 = sphi 0, %s108
    %s109 = sphi 0, %s106
    %s110 = sphi 0, %s109
    %s126 = sphi 0, %s110
    %s130 = sphi 0, %s130
    %s132 = sphi 0, %s130
    %s133 = sphi 0, %s132
    %s147 = sphi 0, %s133
    %s151 = sphi 0, %s151
    %s153 = sphi 0, %s151
    %s154 = sphi 0, %s153
    %s168 = sphi 0, %s154
    %s172 = sphi 0, %s172
    %s174 = sphi 0, %s172
    %s175 = sphi 0, %s174
    %s189 = sphi 0, %s175
    %s193 = sphi 0, %s193
    %s195 = sphi 0, %s193
    %s196 = sphi 0, %s195
    %s210 = sphi 0, %s196
    %s214 = sphi 0, %s214
    %s216 = sphi 0, %s214
    %s217 = sphi 0, %s216
    %s231 = sphi 0, %s217
    %s235 = sphi 0, %s235
    %s237 = sphi 0, %s235
    %s238 = sphi 0, %s237
    %s252 = sphi 0, %s238
    %s256 = sphi 0, %s256
    %s258 = sphi 0, %s256
    %s259 = sphi 0, %s258
    %s273 = sphi 0, %s259
    %s277 = sphi 0, %s277
    %s279 = sphi 0, %s277
    %s280 = sphi 0, %s279
    %s294 = sphi 0, %s280
  $region4: #{tpu_custom_call.1} parent=0 // loop_header_branch
    %21 = sbr.rel (%p19) target = $region8
  $region5: #{tpu_custom_call.1} parent=0 // loop_body
    %s23 = ssub.s32 %s18, 1
    %s24 = ssub.s32 %s18, 2
    %s25 = sadd.s32 %s18, 1
    %s26 = ssub.s32 %s18, %s25
    %p27 = scmp.eq.s32.totalorder %s26, 0
    %s29 = sadd.s32 %s28, 1
    %s30 = scalar_select %p27, %s28, %s29
    %p33 = pneg %p27
    %p34 = scmp.eq.s32.totalorder %s18, 3
    %p35 = por %p33, %p34
    %p36 = scmp.ne.s32.totalorder %s28, %s31
    %p37 = scmp.eq.s32.totalorder %s18, 0
    %p38 = por %p36, %p37
    %p39 = scmp.ne.s32.totalorder %s28, %s31
    %p40 = scmp.eq.s32.totalorder %s23, 3
    %p41 = por %p39, %p40
    %p42 = scmp.ne.s32.totalorder %s31, %s32
    %p43 = scmp.eq.s32.totalorder %s23, 0
    %p44 = por %p42, %p43
    %p45 = scmp.ne.s32.totalorder %s31, %s32
    %p46 = scmp.eq.s32.totalorder %s24, 3
    %p47 = por %p45, %p46
    %p49 = scmp.ne.s32.totalorder %s32, %s48
    %p50 = scmp.eq.s32.totalorder %s24, 0
    %p51 = por %p49, %p50
    %s52 = ssub.s32 %s18, %s25
    %p53 = scmp.eq.s32.totalorder %s52, 0
    %s55 = sadd.s32 %s54, 1
    %s56 = scalar_select %p53, %s54, %s55
    %p59 = pneg %p53
    %p60 = scmp.eq.s32.totalorder %s18, 3
    %p61 = por %p59, %p60
    %p62 = scmp.ne.s32.totalorder %s54, %s57
    %p63 = scmp.eq.s32.totalorder %s18, 0
    %p64 = por %p62, %p63
    %p65 = scmp.ne.s32.totalorder %s54, %s57
    %p66 = scmp.eq.s32.totalorder %s23, 3
    %p67 = por %p65, %p66
    %p68 = scmp.ne.s32.totalorder %s57, %s58
    %p69 = scmp.eq.s32.totalorder %s23, 0
    %p70 = por %p68, %p69
    %p71 = scmp.ne.s32.totalorder %s57, %s58
    %p72 = scmp.eq.s32.totalorder %s24, 3
    %p73 = por %p71, %p72
    %p75 = scmp.ne.s32.totalorder %s58, %s74
    %p76 = scmp.eq.s32.totalorder %s24, 0
    %p77 = por %p75, %p76
    %s78 = ssub.s32 %s18, %s25
    %p79 = scmp.eq.s32.totalorder %s78, 0
    %s81 = sadd.s32 %s80, 1
    %s82 = scalar_select %p79, %s80, %s81
    %p85 = pneg %p79
    %p86 = scmp.eq.s32.totalorder %s18, 3
    %p87 = por %p85, %p86
    %p88 = scmp.ne.s32.totalorder %s80, %s83
    %p89 = scmp.eq.s32.totalorder %s18, 0
    %p90 = por %p88, %p89
    %p91 = scmp.ne.s32.totalorder %s80, %s83
    %p92 = scmp.eq.s32.totalorder %s23, 3
    %p93 = por %p91, %p92
    %p94 = scmp.ne.s32.totalorder %s83, %s84
    %p95 = scmp.eq.s32.totalorder %s23, 0
    %p96 = por %p94, %p95
    %p97 = scmp.ne.s32.totalorder %s83, %s84
    %p98 = scmp.eq.s32.totalorder %s24, 3
    %p99 = por %p97, %p98
    %p101 = scmp.ne.s32.totalorder %s84, %s100
    %p102 = scmp.eq.s32.totalorder %s24, 0
    %p103 = por %p101, %p102
    %s104 = ssub.s32 %s18, %s25
    %p105 = scmp.eq.s32.totalorder %s104, 0
    %s107 = sadd.s32 %s106, 1
    %s108 = scalar_select %p105, %s106, %s107
    %p111 = pneg %p105
    %p112 = scmp.eq.s32.totalorder %s18, 3
    %p113 = por %p111, %p112
    %p114 = scmp.ne.s32.totalorder %s106, %s109
    %p115 = scmp.eq.s32.totalorder %s18, 0
    %p116 = por %p114, %p115
    %p117 = scmp.ne.s32.totalorder %s106, %s109
    %p118 = scmp.eq.s32.totalorder %s23, 3
    %p119 = por %p117, %p118
    %p120 = scmp.ne.s32.totalorder %s109, %s110
    %p121 = scmp.eq.s32.totalorder %s23, 0
    %p122 = por %p120, %p121
    %p123 = scmp.ne.s32.totalorder %s109, %s110
    %p124 = scmp.eq.s32.totalorder %s24, 3
    %p125 = por %p123, %p124
    %p127 = scmp.ne.s32.totalorder %s110, %s126
    %p128 = scmp.eq.s32.totalorder %s24, 0
    %p129 = por %p127, %p128
    %s131 = sadd.s32 %s130, 1
    %p134 = scmp.eq.s32.totalorder %s18, 3
    %p135 = scmp.ne.s32.totalorder %s130, %s132
    %p136 = scmp.eq.s32.totalorder %s18, 0
    %p137 = por %p135, %p136
    %p138 = scmp.ne.s32.totalorder %s130, %s132
    %p139 = scmp.eq.s32.totalorder %s23, 3
    %p140 = por %p138, %p139
    %p141 = scmp.ne.s32.totalorder %s132, %s133
    %p142 = scmp.eq.s32.totalorder %s23, 0
    %p143 = por %p141, %p142
    %p144 = scmp.ne.s32.totalorder %s132, %s133
    %p145 = scmp.eq.s32.totalorder %s24, 3
    %p146 = por %p144, %p145
    %p148 = scmp.ne.s32.totalorder %s133, %s147
    %p149 = scmp.eq.s32.totalorder %s24, 0
    %p150 = por %p148, %p149
    %s152 = sadd.s32 %s151, 1
    %p155 = scmp.eq.s32.totalorder %s18, 3
    %p156 = scmp.ne.s32.totalorder %s151, %s153
    %p157 = scmp.eq.s32.totalorder %s18, 0
    %p158 = por %p156, %p157
    %p159 = scmp.ne.s32.totalorder %s151, %s153
    %p160 = scmp.eq.s32.totalorder %s23, 3
    %p161 = por %p159, %p160
    %p162 = scmp.ne.s32.totalorder %s153, %s154
    %p163 = scmp.eq.s32.totalorder %s23, 0
    %p164 = por %p162, %p163
    %p165 = scmp.ne.s32.totalorder %s153, %s154
    %p166 = scmp.eq.s32.totalorder %s24, 3
    %p167 = por %p165, %p166
    %p169 = scmp.ne.s32.totalorder %s154, %s168
    %p170 = scmp.eq.s32.totalorder %s24, 0
    %p171 = por %p169, %p170
    %s173 = sadd.s32 %s172, 1
    %p176 = scmp.eq.s32.totalorder %s18, 3
    %p177 = scmp.ne.s32.totalorder %s172, %s174
    %p178 = scmp.eq.s32.totalorder %s18, 0
    %p179 = por %p177, %p178
    %p180 = scmp.ne.s32.totalorder %s172, %s174
    %p181 = scmp.eq.s32.totalorder %s23, 3
    %p182 = por %p180, %p181
    %p183 = scmp.ne.s32.totalorder %s174, %s175
    %p184 = scmp.eq.s32.totalorder %s23, 0
    %p185 = por %p183, %p184
    %p186 = scmp.ne.s32.totalorder %s174, %s175
    %p187 = scmp.eq.s32.totalorder %s24, 3
    %p188 = por %p186, %p187
    %p190 = scmp.ne.s32.totalorder %s175, %s189
    %p191 = scmp.eq.s32.totalorder %s24, 0
    %p192 = por %p190, %p191
    %s194 = sadd.s32 %s193, 1
    %p197 = scmp.eq.s32.totalorder %s18, 3
    %p198 = scmp.ne.s32.totalorder %s193, %s195
    %p199 = scmp.eq.s32.totalorder %s18, 0
    %p200 = por %p198, %p199
    %p201 = scmp.ne.s32.totalorder %s193, %s195
    %p202 = scmp.eq.s32.totalorder %s23, 3
    %p203 = por %p201, %p202
    %p204 = scmp.ne.s32.totalorder %s195, %s196
    %p205 = scmp.eq.s32.totalorder %s23, 0
    %p206 = por %p204, %p205
    %p207 = scmp.ne.s32.totalorder %s195, %s196
    %p208 = scmp.eq.s32.totalorder %s24, 3
    %p209 = por %p207, %p208
    %p211 = scmp.ne.s32.totalorder %s196, %s210
    %p212 = scmp.eq.s32.totalorder %s24, 0
    %p213 = por %p211, %p212
    %s215 = sadd.s32 %s214, 1
    %p218 = scmp.eq.s32.totalorder %s18, 3
    %p219 = scmp.ne.s32.totalorder %s214, %s216
    %p220 = scmp.eq.s32.totalorder %s18, 0
    %p221 = por %p219, %p220
    %p222 = scmp.ne.s32.totalorder %s214, %s216
    %p223 = scmp.eq.s32.totalorder %s23, 3
    %p224 = por %p222, %p223
    %p225 = scmp.ne.s32.totalorder %s216, %s217
    %p226 = scmp.eq.s32.totalorder %s23, 0
    %p227 = por %p225, %p226
    %p228 = scmp.ne.s32.totalorder %s216, %s217
    %p229 = scmp.eq.s32.totalorder %s24, 3
    %p230 = por %p228, %p229
    %p232 = scmp.ne.s32.totalorder %s217, %s231
    %p233 = scmp.eq.s32.totalorder %s24, 0
    %p234 = por %p232, %p233
    %s236 = sadd.s32 %s235, 1
    %p239 = scmp.eq.s32.totalorder %s18, 3
    %p240 = scmp.ne.s32.totalorder %s235, %s237
    %p241 = scmp.eq.s32.totalorder %s18, 0
    %p242 = por %p240, %p241
    %p243 = scmp.ne.s32.totalorder %s235, %s237
    %p244 = scmp.eq.s32.totalorder %s23, 3
    %p245 = por %p243, %p244
    %p246 = scmp.ne.s32.totalorder %s237, %s238
    %p247 = scmp.eq.s32.totalorder %s23, 0
    %p248 = por %p246, %p247
    %p249 = scmp.ne.s32.totalorder %s237, %s238
    %p250 = scmp.eq.s32.totalorder %s24, 3
    %p251 = por %p249, %p250
    %p253 = scmp.ne.s32.totalorder %s238, %s252
    %p254 = scmp.eq.s32.totalorder %s24, 0
    %p255 = por %p253, %p254
    %s257 = sadd.s32 %s256, 1
    %p260 = scmp.eq.s32.totalorder %s18, 3
    %p261 = scmp.ne.s32.totalorder %s256, %s258
    %p262 = scmp.eq.s32.totalorder %s18, 0
    %p263 = por %p261, %p262
    %p264 = scmp.ne.s32.totalorder %s256, %s258
    %p265 = scmp.eq.s32.totalorder %s23, 3
    %p266 = por %p264, %p265
    %p267 = scmp.ne.s32.totalorder %s258, %s259
    %p268 = scmp.eq.s32.totalorder %s23, 0
    %p269 = por %p267, %p268
    %p270 = scmp.ne.s32.totalorder %s258, %s259
    %p271 = scmp.eq.s32.totalorder %s24, 3
    %p272 = por %p270, %p271
    %p274 = scmp.ne.s32.totalorder %s259, %s273
    %p275 = scmp.eq.s32.totalorder %s24, 0
    %p276 = por %p274, %p275
    %s278 = sadd.s32 %s277, 1
    %p281 = scmp.eq.s32.totalorder %s18, 3
    %p282 = scmp.ne.s32.totalorder %s277, %s279
    %p283 = scmp.eq.s32.totalorder %s18, 0
    %p284 = por %p282, %p283
    %p285 = scmp.ne.s32.totalorder %s277, %s279
    %p286 = scmp.eq.s32.totalorder %s23, 3
    %p287 = por %p285, %p286
    %p288 = scmp.ne.s32.totalorder %s279, %s280
    %p289 = scmp.eq.s32.totalorder %s23, 0
    %p290 = por %p288, %p289
    %p291 = scmp.ne.s32.totalorder %s279, %s280
    %p292 = scmp.eq.s32.totalorder %s24, 3
    %p293 = por %p291, %p292
    %p295 = scmp.ne.s32.totalorder %s280, %s294
    %p296 = scmp.eq.s32.totalorder %s24, 0
    %p297 = por %p295, %p296
    %p298 = scmp.le.s32.totalorder 1, %s18
    %p299 = scmp.lt.s32.totalorder %s18, 5
    %p300 = pnand %p298, %p299
    %p301 = pneg %p300
    // Predicated region
    $region9: #{tpu_custom_call.1} parent=5 // pred_check
      _
    $region10: #{tpu_custom_call.1} parent=5 // pred_check_branch
      %303 = sbr.rel (%p300) target = $region12
    $region11: #{tpu_custom_call.1} parent=5 // pred_region
      %s304 = ssub.s32 %s18, 1
      // Predicated region
      $region13: #{tpu_custom_call.1} parent=11 // pred_check
        %p305 = pneg %p143
      $region14: #{tpu_custom_call.1} parent=11 // pred_check_branch
        %307 = sbr.rel (%p305) target = $region16
      $region15: #{tpu_custom_call.1} parent=11 // pred_region
        _
      $region16: #{tpu_custom_call.1} parent=11 // pred_fallthru
        _
      // Predicated region
      $region17: #{tpu_custom_call.1} parent=11 // pred_check
        %p308 = pneg %p164
      $region18: #{tpu_custom_call.1} parent=11 // pred_check_branch
        %310 = sbr.rel (%p308) target = $region20
      $region19: #{tpu_custom_call.1} parent=11 // pred_region
        _
      $region20: #{tpu_custom_call.1} parent=11 // pred_fallthru
        _
      // Predicated region
      $region21: #{tpu_custom_call.1} parent=11 // pred_check
        %p311 = pneg %p185
      $region22: #{tpu_custom_call.1} parent=11 // pred_check_branch
        %313 = sbr.rel (%p311) target = $region24
      $region23: #{tpu_custom_call.1} parent=11 // pred_region
        _
      $region24: #{tpu_custom_call.1} parent=11 // pred_fallthru
        _
      // Predicated region
      $region25: #{tpu_custom_call.1} parent=11 // pred_check
        %p314 = pneg %p206
      $region26: #{tpu_custom_call.1} parent=11 // pred_check_branch
        %316 = sbr.rel (%p314) target = $region28
      $region27: #{tpu_custom_call.1} parent=11 // pred_region
        _
      $region28: #{tpu_custom_call.1} parent=11 // pred_fallthru
        _
      // Predicated region
      $region29: #{tpu_custom_call.1} parent=11 // pred_check
        %p317 = pneg %p227
      $region30: #{tpu_custom_call.1} parent=11 // pred_check_branch
        %319 = sbr.rel (%p317) target = $region32
      $region31: #{tpu_custom_call.1} parent=11 // pred_region
        _
      $region32: #{tpu_custom_call.1} parent=11 // pred_fallthru
        _
      // Predicated region
      $region33: #{tpu_custom_call.1} parent=11 // pred_check
        %p320 = pneg %p248
      $region34: #{tpu_custom_call.1} parent=11 // pred_check_branch
        %322 = sbr.rel (%p320) target = $region36
      $region35: #{tpu_custom_call.1} parent=11 // pred_region
        _
      $region36: #{tpu_custom_call.1} parent=11 // pred_fallthru
        _
    $region12: #{tpu_custom_call.1} parent=5 // pred_fallthru
      _
    %p323 = scmp.lt.s32.totalorder %s18, 4
    // Predicated region
    $region37: #{tpu_custom_call.1} parent=5 // pred_check
      %p324 = pneg %p323
    $region38: #{tpu_custom_call.1} parent=5 // pred_check_branch
      %326 = sbr.rel (%p324) target = $region40
    $region39: #{tpu_custom_call.1} parent=5 // pred_region
      // Predicated region
      $region41: #{tpu_custom_call.1} parent=39 // pred_check
        %p327 = pneg %p38
      $region42: #{tpu_custom_call.1} parent=39 // pred_check_branch
        %329 = sbr.rel (%p327) target = $region44
      $region43: #{tpu_custom_call.1} parent=39 // pred_region
        %p330 = scmp.lt.s32.totalorder %s18, 3
        %s331 = scalar_select %p330, %s18, 3
        %s332 = smul.addr %s331, 3
        %s333 = smul.addr %s332, 8
        %s334 = scalar_lea.vmem %s0, %s333
      $region44: #{tpu_custom_call.1} parent=39 // pred_fallthru
        _
      // Predicated region
      $region45: #{tpu_custom_call.1} parent=39 // pred_check
        %p335 = pneg %p64
      $region46: #{tpu_custom_call.1} parent=39 // pred_check_branch
        %337 = sbr.rel (%p335) target = $region48
      $region47: #{tpu_custom_call.1} parent=39 // pred_region
        %p338 = scmp.lt.s32.totalorder %s18, 3
        %s339 = scalar_select %p338, %s18, 3
        %s340 = smul.addr %s339, 3
        %s341 = smul.addr %s340, 8
        %s342 = scalar_lea.vmem %s1, %s341
      $region48: #{tpu_custom_call.1} parent=39 // pred_fallthru
        _
      // Predicated region
      $region49: #{tpu_custom_call.1} parent=39 // pred_check
        %p343 = pneg %p90
      $region50: #{tpu_custom_call.1} parent=39 // pred_check_branch
        %345 = sbr.rel (%p343) target = $region52
      $region51: #{tpu_custom_call.1} parent=39 // pred_region
        %p346 = scmp.lt.s32.totalorder %s18, 3
        %s347 = scalar_select %p346, %s18, 3
        %s348 = smul.addr %s347, 3
        %s349 = smul.addr %s348, 8
        %s350 = scalar_lea.vmem %s2, %s349
      $region52: #{tpu_custom_call.1} parent=39 // pred_fallthru
        _
      // Predicated region
      $region53: #{tpu_custom_call.1} parent=39 // pred_check
        %p351 = pneg %p116
      $region54: #{tpu_custom_call.1} parent=39 // pred_check_branch
        %353 = sbr.rel (%p351) target = $region56
      $region55: #{tpu_custom_call.1} parent=39 // pred_region
        %p354 = scmp.lt.s32.totalorder %s18, 3
        %s355 = scalar_select %p354, %s18, 3
        %s356 = scalar_lea.vmem %s3, %s355
      $region56: #{tpu_custom_call.1} parent=39 // pred_fallthru
        _
    $region40: #{tpu_custom_call.1} parent=5 // pred_fallthru
      _
    %p357 = scmp.le.s32.totalorder 1, %s18
    %p358 = scmp.lt.s32.totalorder %s18, 5
    %p359 = pnand %p357, %p358
    %p360 = pneg %p359
    // Predicated region
    $region57: #{tpu_custom_call.1} parent=5 // pred_check
      _
    $region58: #{tpu_custom_call.1} parent=5 // pred_check_branch
      %362 = sbr.rel (%p359) target = $region60
    $region59: #{tpu_custom_call.1} parent=5 // pred_region
      %s363 = ssub.s32 %s18, 1
      %p364 = scmp.lt.s32.totalorder %s23, 3
      %s365 = scalar_select %p364, %s23, 3
      %s366 = smul.addr %s365, 3
      %s367 = smul.addr %s366, 8
      %s368 = scalar_lea.vmem %s0, %s367
      %p369 = pneg %p44
      %p370 = pneg %p41
      %p371 = scmp.lt.s32.totalorder %s23, 3
      %s372 = scalar_select %p371, %s23, 3
      %s373 = smul.addr %s372, 3
      %s374 = smul.addr %s373, 8
      %s375 = scalar_lea.vmem %s1, %s374
      %p376 = pneg %p70
      %p377 = pneg %p67
      %p378 = scmp.lt.s32.totalorder %s23, 3
      %s379 = scalar_select %p378, %s23, 3
      %s380 = smul.addr %s379, 3
      %s381 = smul.addr %s380, 8
      %s382 = scalar_lea.vmem %s2, %s381
      %p383 = pneg %p96
      %p384 = pneg %p93
      %p385 = scmp.lt.s32.totalorder %s23, 3
      %s386 = scalar_select %p385, %s23, 3
      %s387 = scalar_lea.vmem %s3, %s386
      %p388 = pneg %p122
      %p389 = pneg %p119
      %p390 = pneg %p143
      %p391 = pneg %p140
      %p392 = pneg %p164
      %p393 = pneg %p161
      %p394 = pneg %p185
      %p395 = pneg %p182
      %p396 = pneg %p206
      %p397 = pneg %p203
      %p398 = pneg %p227
      %p399 = pneg %p224
      %p400 = pneg %p248
      %p401 = pneg %p245
      %p402 = pneg %p269
      %p403 = pneg %p266
      %p404 = pneg %p290
      %p405 = pneg %p287
      %p406 = scmp.lt.s32.totalorder %s23, 3
      %s407 = scalar_select %p406, %s23, 3
      %s408 = smul.addr %s407, 3
      %s409 = smul.addr %s408, 8
      %s410 = scalar_lea.vmem %s0, %s409
      %p411 = scmp.lt.s32.totalorder %s23, 3
      %s412 = scalar_select %p411, %s23, 3
      %s413 = smul.addr %s412, 3
      %s414 = smul.addr %s413, 8
      %s415 = scalar_lea.vmem %s1, %s414
      %p416 = scmp.lt.s32.totalorder %s23, 3
      %s417 = scalar_select %p416, %s23, 3
      %s418 = smul.addr %s417, 3
      %s419 = smul.addr %s418, 8
      %s420 = scalar_lea.vmem %s2, %s419
      %p421 = scmp.lt.s32.totalorder %s23, 3
      %s422 = scalar_select %p421, %s23, 3
      %s423 = scalar_lea.vmem %s3, %s422
      %p425 = scmp.eq.s32.totalorder %s23, 0
      // Predicated region
      $region61: #{tpu_custom_call.1} parent=59 // pred_check
        %p426 = pneg %p425
      $region62: #{tpu_custom_call.1} parent=59 // pred_check_branch
        %428 = sbr.rel (%p426) target = $region64
      $region63: #{tpu_custom_call.1} parent=59 // pred_region
        %vm429 = vcmask 261120
        %430 = vst.msk [vmem:[%s10] sm:$0xff] %vm429, 0.0
        %431 = vst.msk [vmem:[%s10 + $0x8] sm:$0xff] %vm429, 0.0
        %432 = vst.msk [vmem:[%s10 + $0x10] sm:$0xff] %vm429, 0.0
        %433 = vst.msk [vmem:[%s10 + $0x18] sm:$0xff] %vm429, 0.0
        %434 = vst.msk [vmem:[%s10 + $0x20] sm:$0xff] %vm429, 0.0
        %435 = vst.msk [vmem:[%s10 + $0x28] sm:$0xff] %vm429, 0.0
        %436 = vst.msk [vmem:[%s10 + $0x30] sm:$0xff] %vm429, 0.0
        %437 = vst.msk [vmem:[%s10 + $0x38] sm:$0xff] %vm429, 0.0
        %438 = vst.msk [vmem:[%s11] sm:$0xff] %vm429, 0.0
        %439 = vst.msk [vmem:[%s11 + $0x8] sm:$0xff] %vm429, 0.0
        %440 = vst.msk [vmem:[%s11 + $0x10] sm:$0xff] %vm429, 0.0
        %441 = vst.msk [vmem:[%s11 + $0x18] sm:$0xff] %vm429, 0.0
        %442 = vst.msk [vmem:[%s11 + $0x20] sm:$0xff] %vm429, 0.0
        %443 = vst.msk [vmem:[%s11 + $0x28] sm:$0xff] %vm429, 0.0
        %444 = vst.msk [vmem:[%s11 + $0x30] sm:$0xff] %vm429, 0.0
        %445 = vst.msk [vmem:[%s11 + $0x38] sm:$0xff] %vm429, 0.0
      $region64: #{tpu_custom_call.1} parent=59 // pred_fallthru
        _
      %v446 = vld [vmem:[%s10] sm:$0xff]
      %v447 = vld [vmem:[%s10 + $0x8] sm:$0xff]
      %v448 = vld [vmem:[%s10 + $0x10] sm:$0xff]
      %v449 = vld [vmem:[%s10 + $0x18] sm:$0xff]
      %v450 = vld [vmem:[%s10 + $0x20] sm:$0xff]
      %v451 = vld [vmem:[%s10 + $0x28] sm:$0xff]
      %v452 = vld [vmem:[%s10 + $0x30] sm:$0xff]
      %v453 = vld [vmem:[%s10 + $0x38] sm:$0xff]
      %v454 = vld [vmem:[%s11] sm:$0xff]
      %v455 = vld [vmem:[%s11 + $0x8] sm:$0xff]
      %v456 = vld [vmem:[%s11 + $0x10] sm:$0xff]
      %v457 = vld [vmem:[%s11 + $0x18] sm:$0xff]
      %v458 = vld [vmem:[%s11 + $0x20] sm:$0xff]
      %v459 = vld [vmem:[%s11 + $0x28] sm:$0xff]
      %v460 = vld [vmem:[%s11 + $0x30] sm:$0xff]
      %v461 = vld [vmem:[%s11 + $0x38] sm:$0xff]
      %v462 = vld [vmem:[%s415] sm:$0xff]
      %v463 = vld [vmem:[%s415 + $0x8] sm:$0xff]
      %v464 = vld [vmem:[%s415 + $0x10] sm:$0xff]
      %v465 = vld [vmem:[%s420] sm:$0xff]
      %v466 = vld [vmem:[%s420 + $0x8] sm:$0xff]
      %v467 = vld [vmem:[%s420 + $0x10] sm:$0xff]
      %v468 = vld [vmem:[%s423] sm:$0x1]
      %v469 = vlaneseq
      %v470 = vand.u32 %v469, 127
      %471 = vset.pattern.permute.xlu0 0
      %472 = vperm.xlu0 %471, %v462
      %v473 = vpop.permute.xlu0 %472
      %474 = vset.pattern.permute.xlu0 0
      %475 = vperm.xlu0 %474, %v463
      %v476 = vpop.permute.xlu0 %475
      %477 = vset.pattern.permute.xlu0 0
      %478 = vperm.xlu0 %477, %v464
      %v479 = vpop.permute.xlu0 %478
      %vm480 = vcmp.eq.s32.totalorder %v470, %v473
      %vm481 = vcmp.eq.s32.totalorder %v470, %v476
      %vm482 = vcmp.eq.s32.totalorder %v470, %v479
      %v483 = vsel %vm480, 1, 0
      %v484 = vsel %vm481, 1, 0
      %v485 = vsel %vm482, 1, 0
      %v486 = vcvt.s32.f32 %v483
      %v487 = vcvt.s32.f32 %v484
      %v488 = vcvt.s32.f32 %v485
      %489 = vset.pattern.permute.xlu0 0
      %490 = vperm.xlu0 %489, %v465
      %v491 = vpop.permute.xlu0 %490
      %492 = vset.pattern.permute.xlu0 0
      %493 = vperm.xlu0 %492, %v466
      %v494 = vpop.permute.xlu0 %493
      %495 = vset.pattern.permute.xlu0 0
      %496 = vperm.xlu0 %495, %v467
      %v497 = vpop.permute.xlu0 %496
      %vm498 = vcmp.eq.s32.totalorder %v470, %v491
      %vm499 = vcmp.eq.s32.totalorder %v470, %v494
      %vm500 = vcmp.eq.s32.totalorder %v470, %v497
      %v501 = vsel %vm498, 1, 0
      %v502 = vsel %vm499, 1, 0
      %v503 = vsel %vm500, 1, 0
      %v504 = vcvt.s32.f32 %v501
      %v505 = vcvt.s32.f32 %v502
      %v506 = vcvt.s32.f32 %v503
      %v507 = vlaneseq
      %v508 = vshrl.u32 %v507, 7
      %v509 = vadd.s32 %v508, 8
      %v510 = vadd.s32 %v508, 16
      %v511 = vadd.s32 %v508, 24
      %v512 = vadd.s32 %v508, 32
      %v513 = vadd.s32 %v508, 40
      %v514 = vadd.s32 %v508, 48
      %v515 = vadd.s32 %v508, 56
      %v516 = vperm.slane %v468, 0
      %vm517 = vcmp.eq.s32.totalorder %v508, %v516
      %vm518 = vcmp.eq.s32.totalorder %v509, %v516
      %vm519 = vcmp.eq.s32.totalorder %v510, %v516
      %vm520 = vcmp.eq.s32.totalorder %v511, %v516
      %vm521 = vcmp.eq.s32.totalorder %v512, %v516
      %vm522 = vcmp.eq.s32.totalorder %v513, %v516
      %vm523 = vcmp.eq.s32.totalorder %v514, %v516
      %vm524 = vcmp.eq.s32.totalorder %v515, %v516
      %v525 = vsel %vm517, 1, 0
      %v526 = vsel %vm518, 1, 0
      %v527 = vsel %vm519, 1, 0
      %v528 = vsel %vm520, 1, 0
      %v529 = vsel %vm521, 1, 0
      %v530 = vsel %vm522, 1, 0
      %v531 = vsel %vm523, 1, 0
      %v532 = vsel %vm524, 1, 0
      %v533 = vcvt.s32.f32 %v525
      %v534 = vcvt.s32.f32 %v526
      %v535 = vcvt.s32.f32 %v527
      %v536 = vcvt.s32.f32 %v528
      %v537 = vcvt.s32.f32 %v529
      %v538 = vcvt.s32.f32 %v530
      %v539 = vcvt.s32.f32 %v531
      %v540 = vcvt.s32.f32 %v532
      %vm541 = vcmask 523264
      %v543 = vsel %vm541, %v486, 0
      %v546 = vsel %vm541, %v487, 0
      %v549 = vsel %vm541, %v488, 0
      %551 = vmatpush.msra.mxu0 0.0
      %552 = vmatpush.msra.mxu0 0.0
      %553 = vmatpush.msra.mxu0 0.0
      %554 = vmatpush.msra.mxu0 0.0
      %555 = vmatpush.msra.mxu0 0.0
      %556 = vmatpush.msra.mxu0 0.0
      %557 = vmatpush.msra.mxu0 0.0
      %558 = vmatpush.msra.mxu0 0.0
      %559 = vmatpush.msra.mxu0 %v453
      %560 = vmatpush.msra.mxu0 %v452
      %561 = vmatpush.msra.mxu0 %v451
      %562 = vmatpush.msra.mxu0 %v450
      %563 = vmatpush.msra.mxu0 %v449
      %564 = vmatpush.msra.mxu0 %v448
      %565 = vmatpush.msra.mxu0 %v447
      %566 = vmatpush.msra.mxu0 %v446
      %567 = vmatmul.f32.gmra.mxu0 %v543
      %v568 = vpop.f32.mrf.mxu0
      %v569 = vadd.f32 0.0, %v568
      %570 = vmatmul.f32.gmra.mxu0 %v546
      %v571 = vpop.f32.mrf.mxu0
      %v572 = vadd.f32 0.0, %v571
      %573 = vmatmul.f32.gmra.mxu0 %v549
      %v574 = vpop.f32.mrf.mxu0
      %v575 = vadd.f32 0.0, %v574
      %576 = vdwg.mxu0
      %v578 = vsel %vm541, %v504, 0
      %v581 = vsel %vm541, %v505, 0
      %v584 = vsel %vm541, %v506, 0
      %586 = vmatpush.msra.mxu0 0.0
      %587 = vmatpush.msra.mxu0 0.0
      %588 = vmatpush.msra.mxu0 0.0
      %589 = vmatpush.msra.mxu0 0.0
      %590 = vmatpush.msra.mxu0 0.0
      %591 = vmatpush.msra.mxu0 0.0
      %592 = vmatpush.msra.mxu0 0.0
      %593 = vmatpush.msra.mxu0 0.0
      %594 = vmatpush.msra.mxu0 %v453
      %595 = vmatpush.msra.mxu0 %v452
      %596 = vmatpush.msra.mxu0 %v451
      %597 = vmatpush.msra.mxu0 %v450
      %598 = vmatpush.msra.mxu0 %v449
      %599 = vmatpush.msra.mxu0 %v448
      %600 = vmatpush.msra.mxu0 %v447
      %601 = vmatpush.msra.mxu0 %v446
      %602 = vmatmul.f32.gmra.mxu0 %v578
      %v603 = vpop.f32.mrf.mxu0
      %v604 = vadd.f32 0.0, %v603
      %605 = vmatmul.f32.gmra.mxu0 %v581
      %v606 = vpop.f32.mrf.mxu0
      %v607 = vadd.f32 0.0, %v606
      %608 = vmatmul.f32.gmra.mxu0 %v584
      %v609 = vpop.f32.mrf.mxu0
      %v610 = vadd.f32 0.0, %v609
      %611 = vdwg.mxu0
      %612 = vmatpush.msra.mxu0 0.0
      %613 = vmatpush.msra.mxu0 0.0
      %614 = vmatpush.msra.mxu0 0.0
      %615 = vmatpush.msra.mxu0 0.0
      %616 = vmatpush.msra.mxu0 0.0
      %617 = vmatpush.msra.mxu0 0.0
      %618 = vmatpush.msra.mxu0 0.0
      %619 = vmatpush.msra.mxu0 0.0
      %620 = vmatpush.msra.mxu0 %v461
      %621 = vmatpush.msra.mxu0 %v460
      %622 = vmatpush.msra.mxu0 %v459
      %623 = vmatpush.msra.mxu0 %v458
      %624 = vmatpush.msra.mxu0 %v457
      %625 = vmatpush.msra.mxu0 %v456
      %626 = vmatpush.msra.mxu0 %v455
      %627 = vmatpush.msra.mxu0 %v454
      %628 = vmatmul.f32.gmra.mxu0 %v543
      %v629 = vpop.f32.mrf.mxu0
      %v630 = vadd.f32 0.0, %v629
      %631 = vmatmul.f32.gmra.mxu0 %v546
      %v632 = vpop.f32.mrf.mxu0
      %v633 = vadd.f32 0.0, %v632
      %634 = vmatmul.f32.gmra.mxu0 %v549
      %v635 = vpop.f32.mrf.mxu0
      %v636 = vadd.f32 0.0, %v635
      %637 = vdwg.mxu0
      %638 = vmatpush.msra.mxu0 0.0
      %639 = vmatpush.msra.mxu0 0.0
      %640 = vmatpush.msra.mxu0 0.0
      %641 = vmatpush.msra.mxu0 0.0
      %642 = vmatpush.msra.mxu0 0.0
      %643 = vmatpush.msra.mxu0 0.0
      %644 = vmatpush.msra.mxu0 0.0
      %645 = vmatpush.msra.mxu0 0.0
      %646 = vmatpush.msra.mxu0 %v461
      %647 = vmatpush.msra.mxu0 %v460
      %648 = vmatpush.msra.mxu0 %v459
      %649 = vmatpush.msra.mxu0 %v458
      %650 = vmatpush.msra.mxu0 %v457
      %651 = vmatpush.msra.mxu0 %v456
      %652 = vmatpush.msra.mxu0 %v455
      %653 = vmatpush.msra.mxu0 %v454
      %654 = vmatmul.f32.gmra.mxu0 %v578
      %v655 = vpop.f32.mrf.mxu0
      %v656 = vadd.f32 0.0, %v655
      %657 = vmatmul.f32.gmra.mxu0 %v581
      %v658 = vpop.f32.mrf.mxu0
      %v659 = vadd.f32 0.0, %v658
      %660 = vmatmul.f32.gmra.mxu0 %v584
      %v661 = vpop.f32.mrf.mxu0
      %v662 = vadd.f32 0.0, %v661
      %663 = vdwg.mxu0
      %v664 = vld [vmem:[%s410] sm:$0xff]
      %v665 = vld [vmem:[%s410 + $0x8] sm:$0xff]
      %v666 = vld [vmem:[%s410 + $0x10] sm:$0xff]
      %v667 = vpack.c.bf16 %v665, %v664
      %v668 = vpack.c.bf16 %v666, %v666
      %v669 = vld [vmem:[%s4] sm:$0xf]
      %v670 = vld [vmem:[%s4 + $0x4] sm:$0xf]
      %v671 = vld [vmem:[%s4 + $0x8] sm:$0xf]
      %v672 = vld [vmem:[%s4 + $0xc] sm:$0xf]
      %v673 = vld [vmem:[%s5] sm:$0x1]
      %v675 = vperm.slane %v673, 0
      %v681 = vunpack.c.l.b16 %v669
      %v682 = vunpack.c.l.b16 %v670
      %v683 = vunpack.c.l.b16 %v671
      %v684 = vunpack.c.l.b16 %v672
      %v685 = vpack.c.b16 %v682, %v681
      %v686 = vpack.c.b16 %v684, %v683
      %vm689 = vcmask 261120
      %v691 = vsel %vm689, %v667, 0
      %v694 = vsel %vm689, %v668, 0
      %696 = vmatpush.bf16.msra.mxu0 0
      %697 = vmatpush.bf16.msra.mxu0 0
      %698 = vmatpush.bf16.msra.mxu0 0
      %699 = vmatpush.bf16.msra.mxu0 0
      %700 = vmatpush.bf16.msra.mxu0 0
      %701 = vmatpush.bf16.msra.mxu0 0
      %702 = vmatpush.bf16.msra.mxu0 %v686
      %703 = vmatpush.bf16.msra.mxu0 %v685
      %704 = vmatmul.bf16.gmra.mxu0 %v691
      %v705 = vpop.f32.mrf.mxu0
      %v706 = vadd.f32 %v675, %v705
      %v707 = vpop.f32.mrf.mxu0
      %v708 = vadd.f32 %v675, %v707
      %709 = vmatmul.bf16.gmra.mxu0 %v694
      %v710 = vpop.f32.mrf.mxu0
      %v711 = vadd.f32 %v675, %v710
      %v712 = vpop.f32.mrf.mxu0
      %713 = vdwg.mxu0
      %v714 = vpack.c.bf16 %v572, %v569
      %v715 = vpack.c.bf16 %v575, %v575
      %v716 = vld [vmem:[%s6] sm:$0xf]
      %v717 = vld [vmem:[%s6 + $0x4] sm:$0xf]
      %v718 = vld [vmem:[%s6 + $0x8] sm:$0xf]
      %v719 = vld [vmem:[%s6 + $0xc] sm:$0xf]
      %v720 = vld [vmem:[%s7] sm:$0x1]
      %v722 = vperm.slane %v720, 0
      %v728 = vunpack.c.l.b16 %v716
      %v729 = vunpack.c.l.b16 %v717
      %v730 = vunpack.c.l.b16 %v718
      %v731 = vunpack.c.l.b16 %v719
      %v732 = vpack.c.b16 %v729, %v728
      %v733 = vpack.c.b16 %v731, %v730
      %v737 = vsel %vm689, %v714, 0
      %v740 = vsel %vm689, %v715, 0
      %742 = vmatpush.bf16.msra.mxu0 0
      %743 = vmatpush.bf16.msra.mxu0 0
      %744 = vmatpush.bf16.msra.mxu0 0
      %745 = vmatpush.bf16.msra.mxu0 0
      %746 = vmatpush.bf16.msra.mxu0 0
      %747 = vmatpush.bf16.msra.mxu0 0
      %748 = vmatpush.bf16.msra.mxu0 %v733
      %749 = vmatpush.bf16.msra.mxu0 %v732
      %750 = vmatmul.bf16.gmra.mxu0 %v737
      %v751 = vpop.f32.mrf.mxu0
      %v752 = vadd.f32 %v722, %v751
      %v753 = vpop.f32.mrf.mxu0
      %v754 = vadd.f32 %v722, %v753
      %755 = vmatmul.bf16.gmra.mxu0 %v740
      %v756 = vpop.f32.mrf.mxu0
      %v757 = vadd.f32 %v722, %v756
      %v758 = vpop.f32.mrf.mxu0
      %759 = vdwg.mxu0
      %v760 = vpack.c.bf16 %v607, %v604
      %v761 = vpack.c.bf16 %v610, %v610
      %v762 = vld [vmem:[%s8] sm:$0xf]
      %v763 = vld [vmem:[%s8 + $0x4] sm:$0xf]
      %v764 = vld [vmem:[%s8 + $0x8] sm:$0xf]
      %v765 = vld [vmem:[%s8 + $0xc] sm:$0xf]
      %v766 = vld [vmem:[%s9] sm:$0x1]
      %v768 = vperm.slane %v766, 0
      %v774 = vunpack.c.l.b16 %v762
      %v775 = vunpack.c.l.b16 %v763
      %v776 = vunpack.c.l.b16 %v764
      %v777 = vunpack.c.l.b16 %v765
      %v778 = vpack.c.b16 %v775, %v774
      %v779 = vpack.c.b16 %v777, %v776
      %v783 = vsel %vm689, %v760, 0
      %v786 = vsel %vm689, %v761, 0
      %788 = vmatpush.bf16.msra.mxu0 0
      %789 = vmatpush.bf16.msra.mxu0 0
      %790 = vmatpush.bf16.msra.mxu0 0
      %791 = vmatpush.bf16.msra.mxu0 0
      %792 = vmatpush.bf16.msra.mxu0 0
      %793 = vmatpush.bf16.msra.mxu0 0
      %794 = vmatpush.bf16.msra.mxu0 %v779
      %795 = vmatpush.bf16.msra.mxu0 %v778
      %796 = vmatmul.bf16.gmra.mxu0 %v783
      %v797 = vpop.f32.mrf.mxu0
      %v798 = vadd.f32 %v768, %v797
      %v799 = vpop.f32.mrf.mxu0
      %v800 = vadd.f32 %v768, %v799
      %801 = vmatmul.bf16.gmra.mxu0 %v786
      %v802 = vpop.f32.mrf.mxu0
      %v803 = vadd.f32 %v768, %v802
      %v804 = vpop.f32.mrf.mxu0
      %805 = vdwg.mxu0
      %v806 = vadd.f32 %v706, %v752
      %v807 = vadd.f32 %v708, %v754
      %v808 = vadd.f32 %v711, %v757
      %v809 = vadd.f32 %v806, %v798
      %v810 = vadd.f32 %v807, %v800
      %v811 = vadd.f32 %v808, %v803
      %v812 = vxor.u32 %v809, 2147483648
      %v813 = vxor.u32 %v810, 2147483648
      %v814 = vxor.u32 %v811, 2147483648
      %v815 = vmul.f32 %v812, 1.442695
      %v816 = vpow.pop %v815
      %v817 = vmul.f32 %v813, 1.442695
      %v818 = vpow.pop %v817
      %v819 = vmul.f32 %v814, 1.442695
      %v820 = vpow.pop %v819
      %v821 = vadd.f32 %v816, 1.0
      %v822 = vadd.f32 %v818, 1.0
      %v823 = vadd.f32 %v820, 1.0
      %v824 = vrcp.pop %v821
      %v825 = vmul.f32 %v821, %v824
      %v826 = vsub.f32 1.0, %v825
      %v827 = vmul.f32 %v824, %v826
      %v828 = vadd.f32 %v824, %v827
      %vm829 = vweird.f32 %v821
      %vm830 = vweird.f32 %v824
      %vm831 = vmor %vm829, %vm830
      %v832 = vsel %vm831, %v824, %v828
      %v833 = vand.u32 2147483647, %v821
      %vm834 = vcmp.eq.f32.partialorder %v833, 8.507059e+37
      %v835 = vand.u32 %v821, 2147483648
      %v836 = vor.u32 1.1754944e-38, %v835
      %v837 = vsel %vm834, %v836, %v832
      %v838 = vmul.f32 1.0, %v837
      %v839 = vrcp.pop %v822
      %v840 = vmul.f32 %v822, %v839
      %v841 = vsub.f32 1.0, %v840
      %v842 = vmul.f32 %v839, %v841
      %v843 = vadd.f32 %v839, %v842
      %vm844 = vweird.f32 %v822
      %vm845 = vweird.f32 %v839
      %vm846 = vmor %vm844, %vm845
      %v847 = vsel %vm846, %v839, %v843
      %v848 = vand.u32 2147483647, %v822
      %vm849 = vcmp.eq.f32.partialorder %v848, 8.507059e+37
      %v850 = vand.u32 %v822, 2147483648
      %v851 = vor.u32 1.1754944e-38, %v850
      %v852 = vsel %vm849, %v851, %v847
      %v853 = vmul.f32 1.0, %v852
      %v854 = vrcp.pop %v823
      %v855 = vmul.f32 %v823, %v854
      %v856 = vsub.f32 1.0, %v855
      %v857 = vmul.f32 %v854, %v856
      %v858 = vadd.f32 %v854, %v857
      %vm859 = vweird.f32 %v823
      %vm860 = vweird.f32 %v854
      %vm861 = vmor %vm859, %vm860
      %v862 = vsel %vm861, %v854, %v858
      %v863 = vand.u32 2147483647, %v823
      %vm864 = vcmp.eq.f32.partialorder %v863, 8.507059e+37
      %v865 = vand.u32 %v823, 2147483648
      %v866 = vor.u32 1.1754944e-38, %v865
      %v867 = vsel %vm864, %v866, %v862
      %v868 = vmul.f32 1.0, %v867
      %v869 = vtanh.pop %v809
      %v870 = vtanh.pop %v810
      %v871 = vtanh.pop %v811
      %v872 = vxor.u32 %v806, 2147483648
      %v873 = vxor.u32 %v807, 2147483648
      %v874 = vxor.u32 %v808, 2147483648
      %v875 = vmul.f32 %v872, 1.442695
      %v876 = vpow.pop %v875
      %v877 = vmul.f32 %v873, 1.442695
      %v878 = vpow.pop %v877
      %v879 = vmul.f32 %v874, 1.442695
      %v880 = vpow.pop %v879
      %v881 = vadd.f32 %v876, 1.0
      %v882 = vadd.f32 %v878, 1.0
      %v883 = vadd.f32 %v880, 1.0
      %v884 = vrcp.pop %v881
      %v885 = vmul.f32 %v881, %v884
      %v886 = vsub.f32 1.0, %v885
      %v887 = vmul.f32 %v884, %v886
      %v888 = vadd.f32 %v884, %v887
      %vm889 = vweird.f32 %v881
      %vm890 = vweird.f32 %v884
      %vm891 = vmor %vm889, %vm890
      %v892 = vsel %vm891, %v884, %v888
      %v893 = vand.u32 2147483647, %v881
      %vm894 = vcmp.eq.f32.partialorder %v893, 8.507059e+37
      %v895 = vand.u32 %v881, 2147483648
      %v896 = vor.u32 1.1754944e-38, %v895
      %v897 = vsel %vm894, %v896, %v892
      %v898 = vmul.f32 1.0, %v897
      %v899 = vrcp.pop %v882
      %v900 = vmul.f32 %v882, %v899
      %v901 = vsub.f32 1.0, %v900
      %v902 = vmul.f32 %v899, %v901
      %v903 = vadd.f32 %v899, %v902
      %vm904 = vweird.f32 %v882
      %vm905 = vweird.f32 %v899
      %vm906 = vmor %vm904, %vm905
      %v907 = vsel %vm906, %v899, %v903
      %v908 = vand.u32 2147483647, %v882
      %vm909 = vcmp.eq.f32.partialorder %v908, 8.507059e+37
      %v910 = vand.u32 %v882, 2147483648
      %v911 = vor.u32 1.1754944e-38, %v910
      %v912 = vsel %vm909, %v911, %v907
      %v913 = vmul.f32 1.0, %v912
      %v914 = vrcp.pop %v883
      %v915 = vmul.f32 %v883, %v914
      %v916 = vsub.f32 1.0, %v915
      %v917 = vmul.f32 %v914, %v916
      %v918 = vadd.f32 %v914, %v917
      %vm919 = vweird.f32 %v883
      %vm920 = vweird.f32 %v914
      %vm921 = vmor %vm919, %vm920
      %v922 = vsel %vm921, %v914, %v918
      %v923 = vand.u32 2147483647, %v883
      %vm924 = vcmp.eq.f32.partialorder %v923, 8.507059e+37
      %v925 = vand.u32 %v883, 2147483648
      %v926 = vor.u32 1.1754944e-38, %v925
      %v927 = vsel %vm924, %v926, %v922
      %v928 = vmul.f32 1.0, %v927
      %v929 = vadd.f32 %v706, %v798
      %v930 = vadd.f32 %v708, %v800
      %v931 = vadd.f32 %v711, %v803
      %v932 = vxor.u32 %v929, 2147483648
      %v933 = vxor.u32 %v930, 2147483648
      %v934 = vxor.u32 %v931, 2147483648
      %v935 = vmul.f32 %v932, 1.442695
      %v936 = vpow.pop %v935
      %v937 = vmul.f32 %v933, 1.442695
      %v938 = vpow.pop %v937
      %v939 = vmul.f32 %v934, 1.442695
      %v940 = vpow.pop %v939
      %v941 = vadd.f32 %v936, 1.0
      %v942 = vadd.f32 %v938, 1.0
      %v943 = vadd.f32 %v940, 1.0
      %v944 = vrcp.pop %v941
      %v945 = vmul.f32 %v941, %v944
      %v946 = vsub.f32 1.0, %v945
      %v947 = vmul.f32 %v944, %v946
      %v948 = vadd.f32 %v944, %v947
      %vm949 = vweird.f32 %v941
      %vm950 = vweird.f32 %v944
      %vm951 = vmor %vm949, %vm950
      %v952 = vsel %vm951, %v944, %v948
      %v953 = vand.u32 2147483647, %v941
      %vm954 = vcmp.eq.f32.partialorder %v953, 8.507059e+37
      %v955 = vand.u32 %v941, 2147483648
      %v956 = vor.u32 1.1754944e-38, %v955
      %v957 = vsel %vm954, %v956, %v952
      %v958 = vmul.f32 1.0, %v957
      %v959 = vrcp.pop %v942
      %v960 = vmul.f32 %v942, %v959
      %v961 = vsub.f32 1.0, %v960
      %v962 = vmul.f32 %v959, %v961
      %v963 = vadd.f32 %v959, %v962
      %vm964 = vweird.f32 %v942
      %vm965 = vweird.f32 %v959
      %vm966 = vmor %vm964, %vm965
      %v967 = vsel %vm966, %v959, %v963
      %v968 = vand.u32 2147483647, %v942
      %vm969 = vcmp.eq.f32.partialorder %v968, 8.507059e+37
      %v970 = vand.u32 %v942, 2147483648
      %v971 = vor.u32 1.1754944e-38, %v970
      %v972 = vsel %vm969, %v971, %v967
      %v973 = vmul.f32 1.0, %v972
      %v974 = vrcp.pop %v943
      %v975 = vmul.f32 %v943, %v974
      %v976 = vsub.f32 1.0, %v975
      %v977 = vmul.f32 %v974, %v976
      %v978 = vadd.f32 %v974, %v977
      %vm979 = vweird.f32 %v943
      %vm980 = vweird.f32 %v974
      %vm981 = vmor %vm979, %vm980
      %v982 = vsel %vm981, %v974, %v978
      %v983 = vand.u32 2147483647, %v943
      %vm984 = vcmp.eq.f32.partialorder %v983, 8.507059e+37
      %v985 = vand.u32 %v943, 2147483648
      %v986 = vor.u32 1.1754944e-38, %v985
      %v987 = vsel %vm984, %v986, %v982
      %v988 = vmul.f32 1.0, %v987
      %992 = vrot.lane.b32.xlu0 %v869, 64
      %v993 = vpop.permute.xlu0 %992
      %994 = vrot.lane.b32.xlu0 %v870, 64
      %v995 = vpop.permute.xlu0 %994
      %996 = vrot.lane.b32.xlu0 %v871, 64
      %v997 = vpop.permute.xlu0 %996
      %v1001 = vmul.f32 %v838, %v993
      %v1002 = vmul.f32 %v853, %v995
      %v1003 = vmul.f32 %v868, %v997
      %1007 = vrot.lane.b32.xlu0 %v630, 96
      %v1008 = vpop.permute.xlu0 %1007
      %1009 = vrot.lane.b32.xlu0 %v633, 96
      %v1010 = vpop.permute.xlu0 %1009
      %1011 = vrot.lane.b32.xlu0 %v636, 96
      %v1012 = vpop.permute.xlu0 %1011
      %v1016 = vmul.f32 %v898, %v1008
      %v1017 = vmul.f32 %v913, %v1010
      %v1018 = vmul.f32 %v928, %v1012
      %1022 = vrot.lane.b32.xlu0 %v1016, 32
      %v1023 = vpop.permute.xlu0 %1022
      %1024 = vrot.lane.b32.xlu0 %v1017, 32
      %v1025 = vpop.permute.xlu0 %1024
      %1026 = vrot.lane.b32.xlu0 %v1018, 32
      %v1027 = vpop.permute.xlu0 %1026
      %v1031 = vadd.f32 %v1001, %v1023
      %v1032 = vadd.f32 %v1002, %v1025
      %v1033 = vadd.f32 %v1003, %v1027
      %1037 = vrot.lane.b32.xlu0 %v656, 96
      %v1038 = vpop.permute.xlu0 %1037
      %1039 = vrot.lane.b32.xlu0 %v659, 96
      %v1040 = vpop.permute.xlu0 %1039
      %1041 = vrot.lane.b32.xlu0 %v662, 96
      %v1042 = vpop.permute.xlu0 %1041
      %v1046 = vmul.f32 %v958, %v1038
      %v1047 = vmul.f32 %v973, %v1040
      %v1048 = vmul.f32 %v988, %v1042
      %1052 = vrot.lane.b32.xlu0 %v1046, 32
      %v1053 = vpop.permute.xlu0 %1052
      %1054 = vrot.lane.b32.xlu0 %v1047, 32
      %v1055 = vpop.permute.xlu0 %1054
      %1056 = vrot.lane.b32.xlu0 %v1048, 32
      %v1057 = vpop.permute.xlu0 %1056
      %v1061 = vadd.f32 %v1031, %v1053
      %v1062 = vadd.f32 %v1032, %v1055
      %v1063 = vadd.f32 %v1033, %v1057
      %v1064 = vtanh.pop %v1061
      %v1065 = vtanh.pop %v1062
      %v1066 = vtanh.pop %v1063
      %1070 = vrot.lane.b32.xlu0 %v1064, 32
      %v1071 = vpop.permute.xlu0 %1070
      %1072 = vrot.lane.b32.xlu0 %v1065, 32
      %v1073 = vpop.permute.xlu0 %1072
      %1074 = vrot.lane.b32.xlu0 %v1066, 32
      %v1075 = vpop.permute.xlu0 %1074
      %v1079 = vmul.f32 %v838, %v1071
      %v1080 = vmul.f32 %v853, %v1073
      %v1081 = vmul.f32 %v868, %v1075
      %1085 = vrot.lane.b32.xlu0 %v1079, 96
      %v1086 = vpop.permute.xlu0 %1085
      %1087 = vrot.lane.b32.xlu0 %v1080, 96
      %v1088 = vpop.permute.xlu0 %1087
      %1089 = vrot.lane.b32.xlu0 %v1081, 96
      %v1090 = vpop.permute.xlu0 %1089
      %vm1094 = vcmask 195584
      %v1096 = vsel %vm1094, %v533, 0
      %v1099 = vsel %vm1094, %v534, 0
      %v1102 = vsel %vm1094, %v535, 0
      %v1105 = vsel %vm1094, %v536, 0
      %v1108 = vsel %vm1094, %v537, 0
      %v1111 = vsel %vm1094, %v538, 0
      %v1114 = vsel %vm1094, %v539, 0
      %v1117 = vsel %vm1094, %v540, 0
      %1119 = vmatpush.msra.mxu0 0.0
      %1120 = vmatpush.msra.mxu0 0.0
      %1121 = vmatpush.msra.mxu0 0.0
      %1122 = vmatpush.msra.mxu0 0.0
      %1123 = vmatpush.msra.mxu0 0.0
      %1124 = vmatpush.msra.mxu0 0.0
      %1125 = vmatpush.msra.mxu0 0.0
      %1126 = vmatpush.msra.mxu0 0.0
      %1127 = vmatpush.msra.mxu0 0.0
      %1128 = vmatpush.msra.mxu0 0.0
      %1129 = vmatpush.msra.mxu0 0.0
      %1130 = vmatpush.msra.mxu0 0.0
      %1131 = vmatpush.msra.mxu0 0.0
      %1132 = vmatpush.msra.mxu0 %v1090
      %1133 = vmatpush.msra.mxu0 %v1088
      %1134 = vmatpush.msra.mxu0 %v1086
      %1135 = vmatmul.f32.gmra.mxu0 %v1096
      %v1136 = vpop.f32.mrf.mxu0
      %v1137 = vadd.f32 0.0, %v1136
      %1138 = vmatmul.f32.gmra.mxu0 %v1099
      %v1139 = vpop.f32.mrf.mxu0
      %v1140 = vadd.f32 0.0, %v1139
      %1141 = vmatmul.f32.gmra.mxu0 %v1102
      %v1142 = vpop.f32.mrf.mxu0
      %v1143 = vadd.f32 0.0, %v1142
      %1144 = vmatmul.f32.gmra.mxu0 %v1105
      %v1145 = vpop.f32.mrf.mxu0
      %v1146 = vadd.f32 0.0, %v1145
      %1147 = vmatmul.f32.gmra.mxu0 %v1108
      %v1148 = vpop.f32.mrf.mxu0
      %v1149 = vadd.f32 0.0, %v1148
      %1150 = vmatmul.f32.gmra.mxu0 %v1111
      %v1151 = vpop.f32.mrf.mxu0
      %v1152 = vadd.f32 0.0, %v1151
      %1153 = vmatmul.f32.gmra.mxu0 %v1114
      %v1154 = vpop.f32.mrf.mxu0
      %v1155 = vadd.f32 0.0, %v1154
      %1156 = vmatmul.f32.gmra.mxu0 %v1117
      %v1157 = vpop.f32.mrf.mxu0
      %v1158 = vadd.f32 0.0, %v1157
      %1159 = vdwg.mxu0
      %v1160 = vadd.f32 %v446, %v1137
      %v1161 = vadd.f32 %v447, %v1140
      %v1162 = vadd.f32 %v448, %v1143
      %v1163 = vadd.f32 %v449, %v1146
      %v1164 = vadd.f32 %v450, %v1149
      %v1165 = vadd.f32 %v451, %v1152
      %v1166 = vadd.f32 %v452, %v1155
      %v1167 = vadd.f32 %v453, %v1158
      %1168 = vst.msk [vmem:[%s10] sm:$0xff] %vm689, %v1160
      %1169 = vst.msk [vmem:[%s10 + $0x8] sm:$0xff] %vm689, %v1161
      %1170 = vst.msk [vmem:[%s10 + $0x10] sm:$0xff] %vm689, %v1162
      %1171 = vst.msk [vmem:[%s10 + $0x18] sm:$0xff] %vm689, %v1163
      %1172 = vst.msk [vmem:[%s10 + $0x20] sm:$0xff] %vm689, %v1164
      %1173 = vst.msk [vmem:[%s10 + $0x28] sm:$0xff] %vm689, %v1165
      %1174 = vst.msk [vmem:[%s10 + $0x30] sm:$0xff] %vm689, %v1166
      %1175 = vst.msk [vmem:[%s10 + $0x38] sm:$0xff] %vm689, %v1167
      %1176 = vmatpush.msra.mxu0 0.0
      %1177 = vmatpush.msra.mxu0 0.0
      %1178 = vmatpush.msra.mxu0 0.0
      %1179 = vmatpush.msra.mxu0 0.0
      %1180 = vmatpush.msra.mxu0 0.0
      %1181 = vmatpush.msra.mxu0 0.0
      %1182 = vmatpush.msra.mxu0 0.0
      %1183 = vmatpush.msra.mxu0 0.0
      %1184 = vmatpush.msra.mxu0 0.0
      %1185 = vmatpush.msra.mxu0 0.0
      %1186 = vmatpush.msra.mxu0 0.0
      %1187 = vmatpush.msra.mxu0 0.0
      %1188 = vmatpush.msra.mxu0 0.0
      %1189 = vmatpush.msra.mxu0 %v1063
      %1190 = vmatpush.msra.mxu0 %v1062
      %1191 = vmatpush.msra.mxu0 %v1061
      %1192 = vmatmul.f32.gmra.mxu0 %v1096
      %v1193 = vpop.f32.mrf.mxu0
      %v1194 = vadd.f32 0.0, %v1193
      %1195 = vmatmul.f32.gmra.mxu0 %v1099
      %v1196 = vpop.f32.mrf.mxu0
      %v1197 = vadd.f32 0.0, %v1196
      %1198 = vmatmul.f32.gmra.mxu0 %v1102
      %v1199 = vpop.f32.mrf.mxu0
      %v1200 = vadd.f32 0.0, %v1199
      %1201 = vmatmul.f32.gmra.mxu0 %v1105
      %v1202 = vpop.f32.mrf.mxu0
      %v1203 = vadd.f32 0.0, %v1202
      %1204 = vmatmul.f32.gmra.mxu0 %v1108
      %v1205 = vpop.f32.mrf.mxu0
      %v1206 = vadd.f32 0.0, %v1205
      %1207 = vmatmul.f32.gmra.mxu0 %v1111
      %v1208 = vpop.f32.mrf.mxu0
      %v1209 = vadd.f32 0.0, %v1208
      %1210 = vmatmul.f32.gmra.mxu0 %v1114
      %v1211 = vpop.f32.mrf.mxu0
      %v1212 = vadd.f32 0.0, %v1211
      %1213 = vmatmul.f32.gmra.mxu0 %v1117
      %v1214 = vpop.f32.mrf.mxu0
      %v1215 = vadd.f32 0.0, %v1214
      %1216 = vdwg.mxu0
      %v1217 = vadd.f32 %v454, %v1194
      %v1218 = vadd.f32 %v455, %v1197
      %v1219 = vadd.f32 %v456, %v1200
      %v1220 = vadd.f32 %v457, %v1203
      %v1221 = vadd.f32 %v458, %v1206
      %v1222 = vadd.f32 %v459, %v1209
      %v1223 = vadd.f32 %v460, %v1212
      %v1224 = vadd.f32 %v461, %v1215
      %1225 = vst.msk [vmem:[%s11] sm:$0xff] %vm689, %v1217
      %1226 = vst.msk [vmem:[%s11 + $0x8] sm:$0xff] %vm689, %v1218
      %1227 = vst.msk [vmem:[%s11 + $0x10] sm:$0xff] %vm689, %v1219
      %1228 = vst.msk [vmem:[%s11 + $0x18] sm:$0xff] %vm689, %v1220
      %1229 = vst.msk [vmem:[%s11 + $0x20] sm:$0xff] %vm689, %v1221
      %1230 = vst.msk [vmem:[%s11 + $0x28] sm:$0xff] %vm689, %v1222
      %1231 = vst.msk [vmem:[%s11 + $0x30] sm:$0xff] %vm689, %v1223
      %1232 = vst.msk [vmem:[%s11 + $0x38] sm:$0xff] %vm689, %v1224
      // Predicated region
      $region65: #{tpu_custom_call.1} parent=59 // pred_check
        %p1233 = pneg %p266
      $region66: #{tpu_custom_call.1} parent=59 // pred_check_branch
        %1235 = sbr.rel (%p1233) target = $region68
      $region67: #{tpu_custom_call.1} parent=59 // pred_region
        _
      $region68: #{tpu_custom_call.1} parent=59 // pred_fallthru
        _
      // Predicated region
      $region69: #{tpu_custom_call.1} parent=59 // pred_check
        %p1236 = pneg %p287
      $region70: #{tpu_custom_call.1} parent=59 // pred_check_branch
        %1238 = sbr.rel (%p1236) target = $region72
      $region71: #{tpu_custom_call.1} parent=59 // pred_region
        _
      $region72: #{tpu_custom_call.1} parent=59 // pred_fallthru
        _
      // Predicated region
      $region73: #{tpu_custom_call.1} parent=59 // pred_check
        %p1239 = pneg %p266
      $region74: #{tpu_custom_call.1} parent=59 // pred_check_branch
        %1241 = sbr.rel (%p1239) target = $region76
      $region75: #{tpu_custom_call.1} parent=59 // pred_region
        _
      $region76: #{tpu_custom_call.1} parent=59 // pred_fallthru
        _
      // Predicated region
      $region77: #{tpu_custom_call.1} parent=59 // pred_check
        %p1242 = pneg %p287
      $region78: #{tpu_custom_call.1} parent=59 // pred_check_branch
        %1244 = sbr.rel (%p1242) target = $region80
      $region79: #{tpu_custom_call.1} parent=59 // pred_region
        _
      $region80: #{tpu_custom_call.1} parent=59 // pred_fallthru
        _
    $region60: #{tpu_custom_call.1} parent=5 // pred_fallthru
      _
    %p1245 = scmp.le.s32.totalorder 2, %s18
    // Predicated region
    $region81: #{tpu_custom_call.1} parent=5 // pred_check
      %p1246 = pneg %p1245
    $region82: #{tpu_custom_call.1} parent=5 // pred_check_branch
      %1248 = sbr.rel (%p1246) target = $region84
    $region83: #{tpu_custom_call.1} parent=5 // pred_region
      %s1249 = ssub.s32 %s18, 2
    $region84: #{tpu_custom_call.1} parent=5 // pred_fallthru
      _
  $region6: #{tpu_custom_call.1} parent=0 // loop_footer
    %s22 = sadd.s32 1, %s18
  $region7: #{tpu_custom_call.1} parent=0 // loop_footer_branch
    %17 = sbr.rel target = $region3
  $region8: #{tpu_custom_call.1} parent=0 // loop_exit
    _

</llo_original>
